<compile_context>
chip_gen: v7x
topology: tpu7x:2x2x1
jax: 0.10.0
libtpu: 0.0.40
codegen_flags: <defaults>
</compile_context>

<pallas_src>
import numpy as np

import jax
import jax.numpy as jnp
from jax.experimental import pallas as pl
from jax.experimental.pallas import tpu as pltpu

HEADS = 4
DIM_HEAD = 64
INNER = HEADS * DIM_HEAD          # 256
SCALE = DIM_HEAD ** (-0.5)
NEG_INF = -1e9


def _attention_kernel(scalars_ref,   # SMEM (8,) f32: [vw, vb, jw0, jw1, jb, 0, 0, 0]
                      blk_has_ref,   # SMEM (nb,) i32: 1 if any batch in block has lab data
                      img_ref,       # (BQ, E)  f32  image rows (flattened batch block)
                      lab_ref,       # (BK, E)  bf16 lab rows (flattened batch block)
                      aux_ref,       # (1, 3, BK) f32: [test_bias; lab_values; mask]
                      same_ref,      # (BQ, BK) f32 same-batch template (resident)
                      wq_ref,        # (E, INNER) bf16 (resident)
                      wkvo_ref,      # (E, INNER + HEADS*E) bf16 = [Wk | Wv@Wo] (resident)
                      bo_ref,        # (1, E) f32 (resident)
                      out_ref):      # (BQ, E) f32
    has_lab_block = blk_has_ref[pl.program_id(0)] != 0

    # Whole block has no lab data -> pure passthrough, skip all matmuls.
    @pl.when(jnp.logical_not(has_lab_block))
    def _():
        out_ref[...] = img_ref[...]

    @pl.when(has_lab_block)
    def _():
        img = img_ref[...]                                   # (BQ, E) f32 (residual)
        lab = lab_ref[...]                                   # (BK, E) bf16
        BQ = img.shape[0]
        E = img.shape[1]

        # Projections (MXU, bf16 x bf16 -> f32 accumulate).
        q = jnp.dot(img.astype(jnp.bfloat16), wq_ref[...],
                    preferred_element_type=jnp.float32)      # (BQ, INNER)
        kvo = jnp.dot(lab, wkvo_ref[...],
                      preferred_element_type=jnp.float32)    # (BK, INNER + H*E)
        q = q.astype(jnp.bfloat16)
        k = kvo[:, :INNER].astype(jnp.bfloat16)              # (BK, INNER)
        vwo = kvo[:, INNER:].astype(jnp.bfloat16)            # (BK, HEADS*E)

        # Lab-test / lab-value joint bias (f32; tanh -> EUP slot).
        # clamp(-5, 5) is a no-op on tanh's [-1, 1] range.
        vw = scalars_ref[0]
        vb = scalars_ref[1]
        jw0 = scalars_ref[2]
        jw1 = scalars_ref[3]
        jb = scalars_ref[4]
        aux = aux_ref[0]                                     # (3, BK)
        tb = aux[0:1, :]                                     # (1, BK)
        lv = aux[1:2, :]                                     # (1, BK)
        msk = aux[2:3, :]                                    # (1, BK)
        bias = jnp.tanh(jw0 * tb + jw1 * (vw * lv + vb) + jb)   # (1, BK)

        # Validity = same-batch AND unmasked; invalid entries get additive
        # NEG_INF (exp underflows to exactly 0, same weights as masked_fill).
        valid = same_ref[...] * msk                          # (BQ, BK)
        combined = jnp.where(valid > 0.0, bias, NEG_INF)     # (BQ, BK)
        # Per-row "this batch has lab data" flag for the final passthrough.
        row_has = jnp.max(valid, axis=-1, keepdims=True) > 0.0   # (BQ, 1)

        # Per-head scores against the whole key block, stacked on sublanes so
        # ONE softmax (max/exp/sum/recip) covers all heads + batches.
        s_parts = []
        for h in range(HEADS):
            lo = h * DIM_HEAD
            s = jax.lax.dot_general(
                q[:, lo:lo + DIM_HEAD], k[:, lo:lo + DIM_HEAD],
                (((1,), (1,)), ((), ())),
                preferred_element_type=jnp.float32)          # (BQ, BK)
            s_parts.append(s * SCALE + combined)
        s_all = jnp.concatenate(s_parts, axis=0)             # (HEADS*BQ, BK)

        m = jnp.max(s_all, axis=-1, keepdims=True)
        e = jnp.exp(s_all - m)
        denom = jnp.sum(e, axis=-1, keepdims=True)
        p_all = (e * pl.reciprocal(denom, approx=True)).astype(jnp.bfloat16)

        # attention * (Wv @ Wo fused) per head, accumulated in registers.
        # Cross-batch / masked weights are exactly zero, so this equals
        # per-batch attention + output projection + bias + residual.
        # Dropout(0.1) is identity at inference.
        fused = bo_ref[...] + img                            # (BQ, E) f32
        for h in range(HEADS):
            p_h = p_all[h * BQ:(h + 1) * BQ, :]              # (BQ, BK) bf16
            vwo_h = vwo[:, h * E:(h + 1) * E]                # (BK, E)  bf16
            fused = fused + jnp.dot(p_h, vwo_h,
                                    preferred_element_type=jnp.float32)

        # Batches with no lab data pass the image embedding through unchanged.
        out_ref[...] = jnp.where(row_has, fused, img)


def _build_call(nb, b_blk, Q, K, E):
    BQ = b_blk * Q
    BK = b_blk * K
    grid_spec = pltpu.PrefetchScalarGridSpec(
        num_scalar_prefetch=2,                 # scalars + per-block has-lab flags
        grid=(nb,),
        in_specs=[
            pl.BlockSpec((BQ, E), lambda i, s, f: (i, 0)),             # image (flat, f32)
            pl.BlockSpec((BK, E), lambda i, s, f: (i, 0)),             # lab (flat, bf16)
            pl.BlockSpec((1, 3, BK), lambda i, s, f: (i, 0, 0)),       # [tb; lv; mask]
            # Resident inputs (constant index_map -> stay in VMEM across steps):
            pl.BlockSpec((BQ, BK), lambda i, s, f: (0, 0)),            # same-batch template
            pl.BlockSpec((E, INNER), lambda i, s, f: (0, 0)),          # Wq (bf16)
            pl.BlockSpec((E, INNER + HEADS * E), lambda i, s, f: (0, 0)),  # [Wk | WvWo] (bf16)
            pl.BlockSpec((1, E), lambda i, s, f: (0, 0)),              # bo (f32)
        ],
        out_specs=pl.BlockSpec((BQ, E), lambda i, s, f: (i, 0)),
    )
    return pl.pallas_call(
        _attention_kernel,
        out_shape=jax.ShapeDtypeStruct((nb * BQ, E), jnp.float32),
        grid_spec=grid_spec,
        compiler_params=pltpu.CompilerParams(
            dimension_semantics=("parallel",)),                        # v7x: 2 TCs
    )


def init_params(key, embed_dim, num_lab_tests):
    ks = jax.random.split(key, 8)
    s = 0.02
    return {
        "wq": s * jax.random.normal(ks[0], (embed_dim, INNER), jnp.float32),
        "wk": s * jax.random.normal(ks[1], (embed_dim, INNER), jnp.float32),
        "wv": s * jax.random.normal(ks[2], (embed_dim, INNER), jnp.float32),
        "wo": s * jax.random.normal(ks[3], (INNER, embed_dim), jnp.float32),
        "bo": s * jax.random.normal(ks[4], (1, embed_dim), jnp.float32),
        "lab_test_emb": s * jax.random.normal(
            ks[5], (num_lab_tests + 1, 1), jnp.float32),
        "value_w": jnp.float32(0.7),
        "value_b": jnp.float32(-0.1),
        "joint_w0": jnp.float32(0.5),
        "joint_w1": jnp.float32(0.3),
        "joint_b": jnp.float32(0.05),
    }


def cross_attention_fusion(params, image_embedding, lab_embeddings, mask,
                           lab_test_indices, lab_values, *, b_blk=16):
    if image_embedding.ndim == 2:
        image_embedding = image_embedding[:, None, :]
    x = image_embedding.astype(jnp.float32)
    lab = lab_embeddings.astype(jnp.float32)
    B, Q, E = x.shape
    K = lab.shape[1]

    # Embedding-table gather (glue) + dtype normalization.
    test_bias = params["lab_test_emb"][lab_test_indices, 0].astype(jnp.float32)  # (B, K)
    lv = lab_values.astype(jnp.float32)
    msk = mask.astype(jnp.float32)

    # Pad batch to a multiple of the batch block (padded rows have mask == 0
    # -> passthrough of zero rows, sliced away below).
    nb = -(-B // b_blk)
    Bp = nb * b_blk
    pad = Bp - B
    if pad:
        x = jnp.pad(x, ((0, pad), (0, 0), (0, 0)))
        lab = jnp.pad(lab, ((0, pad), (0, 0), (0, 0)))
        test_bias = jnp.pad(test_bias, ((0, pad), (0, 0)))
        lv = jnp.pad(lv, ((0, pad), (0, 0)))
        msk = jnp.pad(msk, ((0, pad), (0, 0)))

    # Flatten to lane-major 2-D slabs (no in-kernel reshapes).  Residual image
    # path stays f32; lab feeds matmuls only -> bf16.
    img_flat = x.reshape(Bp * Q, E)
    lab_flat = lab.reshape(Bp * K, E).astype(jnp.bfloat16)

    # Pack [test_bias; lab_values; mask] into one per-block input (one DMA).
    aux = jnp.stack([test_bias, lv, msk], axis=1)                     # (Bp, 3, K)
    aux_blk = (aux.reshape(nb, b_blk, 3, K)
                  .transpose(0, 2, 1, 3)
                  .reshape(nb, 3, b_blk * K))                         # (nb, 3, BK)
    blk_has = (jnp.sum(msk.reshape(nb, b_blk * K), axis=1) > 0).astype(jnp.int32)

    # Block-diagonal same-batch template (resident constant in the kernel).
    rb = np.arange(b_blk * Q) // Q
    cb = np.arange(b_blk * K) // K
    same = jnp.asarray((rb[:, None] == cb[None, :]).astype(np.float32))   # (BQ, BK)

    # Fuse Wv @ Wo per head -> (E, HEADS*E); concat with Wk -> one lab matmul.
    wv, wo = params["wv"], params["wo"]
    wvwo = jnp.concatenate(
        [wv[:, h * DIM_HEAD:(h + 1) * DIM_HEAD]
         @ wo[h * DIM_HEAD:(h + 1) * DIM_HEAD, :] for h in range(HEADS)],
        axis=1)                                                       # (E, HEADS*E)
    wkvo = jnp.concatenate([params["wk"], wvwo], axis=1).astype(jnp.bfloat16)
    wq = params["wq"].astype(jnp.bfloat16)

    scalars = jnp.array(
        [params["value_w"], params["value_b"], params["joint_w0"],
         params["joint_w1"], params["joint_b"], 0.0, 0.0, 0.0], jnp.float32)

    out_flat = _build_call(nb, b_blk, Q, K, E)(
        scalars, blk_has,
        img_flat, lab_flat, aux_blk, same,
        wq, wkvo, params["bo"].astype(jnp.float32))
    return out_flat.reshape(Bp, Q, E)[:B]                             # (B, Q, E)


def reference(params, image_embedding, lab_embeddings, mask,
              lab_test_indices, lab_values):
    # Pure-JAX f32 reference replicating the PyTorch forward (eval mode).
    x = image_embedding[:, None, :] if image_embedding.ndim == 2 else image_embedding
    x = x.astype(jnp.float32)
    lab = lab_embeddings.astype(jnp.float32)
    B, Q, E = x.shape
    K = lab.shape[1]
    q = (x @ params["wq"]).reshape(B, Q, HEADS, DIM_HEAD).transpose(0, 2, 1, 3)
    k = (lab @ params["wk"]).reshape(B, K, HEADS, DIM_HEAD).transpose(0, 2, 1, 3)
    v = (lab @ params["wv"]).reshape(B, K, HEADS, DIM_HEAD).transpose(0, 2, 1, 3)
    s = jnp.einsum("bhqd,bhkd->bhqk", q, k) * SCALE
    test_bias = params["lab_test_emb"][lab_test_indices, 0]
    value_bias = params["value_w"] * lab_values + params["value_b"]
    joint = jnp.tanh(params["joint_w0"] * test_bias
                     + params["joint_w1"] * value_bias + params["joint_b"])
    bias = jnp.clip(joint, -5.0, 5.0)
    s = s + bias[:, None, None, :]
    s = jnp.where(mask[:, None, None, :] == 0, -1e9, s)
    p = jax.nn.softmax(s, axis=-1)
    att = jnp.einsum("bhqk,bhkd->bhqd", p, v)
    att = att.transpose(0, 2, 1, 3).reshape(B, Q, INNER)
    fused = att @ params["wo"] + params["bo"]
    out = fused + x
    no_lab = jnp.sum(mask, axis=1) == 0
    return jnp.where(no_lab[:, None, None], x, out)


if __name__ == "__main__":
    E, K = 32, 8
    num_lab_tests = 10
    params = init_params(jax.random.PRNGKey(42), E, num_lab_tests)
    # bf16 matmul inputs -> loosen tolerance vs. the f32 reference.
    RTOL = ATOL = 1e-2

    # --- test 1: small batch (2-D image input, one empty-mask batch) ---
    B = 2
    k_img, k_lab, k_idx, k_val = jax.random.split(jax.random.PRNGKey(0), 4)
    image_embedding = jax.random.normal(k_img, (B, E), jnp.float32)       # 2-D path
    lab_embeddings = jax.random.normal(k_lab, (B, K, E), jnp.float32)
    lab_test_indices = jax.random.randint(k_idx, (B, K), 0, num_lab_tests + 1)
    lab_values = jax.random.normal(k_val, (B, K), jnp.float32)
    mask = jnp.array([[1, 1, 1, 0, 1, 0, 1, 1],
                      [0, 0, 0, 0, 0, 0, 0, 0]], jnp.float32)

    out = cross_attention_fusion(params, image_embedding, lab_embeddings,
                                 mask, lab_test_indices, lab_values)
    out = jax.block_until_ready(out)
    ref = reference(params, image_embedding, lab_embeddings, mask,
                    lab_test_indices, lab_values)
    assert out.shape == (B, 1, E)
    assert jnp.allclose(out, ref, rtol=RTOL, atol=ATOL), (
        f"max abs err {jnp.max(jnp.abs(out - ref))}")

    # --- test 2: medium batch (padding, mixed masks, 3-D image input) ---
    B2 = 10
    k2 = jax.random.split(jax.random.PRNGKey(1), 5)
    img2 = jax.random.normal(k2[0], (B2, 1, E), jnp.float32)              # 3-D path
    lab2 = jax.random.normal(k2[1], (B2, K, E), jnp.float32)
    idx2 = jax.random.randint(k2[2], (B2, K), 0, num_lab_tests + 1)
    val2 = jax.random.normal(k2[3], (B2, K), jnp.float32)
    mask2 = (jax.random.uniform(k2[4], (B2, K)) > 0.4).astype(jnp.float32)
    mask2 = mask2.at[3].set(0.0)                                          # one empty batch

    out2 = cross_attention_fusion(params, img2, lab2, mask2, idx2, val2)
    out2 = jax.block_until_ready(out2)
    ref2 = reference(params, img2, lab2, mask2, idx2, val2)
    assert out2.shape == (B2, 1, E)
    assert jnp.allclose(out2, ref2, rtol=RTOL, atol=ATOL), (
        f"max abs err {jnp.max(jnp.abs(out2 - ref2))}")

    # --- test 3: multi-block grid (nb=3), one entirely empty block ---
    B3 = 40
    k3 = jax.random.split(jax.random.PRNGKey(2), 5)
    img3 = jax.random.normal(k3[0], (B3, 1, E), jnp.float32)
    lab3 = jax.random.normal(k3[1], (B3, K, E), jnp.float32)
    idx3 = jax.random.randint(k3[2], (B3, K), 0, num_lab_tests + 1)
    val3 = jax.random.normal(k3[3], (B3, K), jnp.float32)
    mask3 = (jax.random.uniform(k3[4], (B3, K)) > 0.3).astype(jnp.float32)
    mask3 = mask3.at[16:32].set(0.0)       # whole second block -> passthrough branch
    mask3 = mask3.at[5].set(0.0)           # lone empty batch inside a has-lab block

    out3 = cross_attention_fusion(params, img3, lab3, mask3, idx3, val3)
    out3 = jax.block_until_ready(out3)
    ref3 = reference(params, img3, lab3, mask3, idx3, val3)
    assert out3.shape == (B3, 1, E)
    assert jnp.allclose(out3, ref3, rtol=RTOL, atol=ATOL), (
        f"max abs err {jnp.max(jnp.abs(out3 - ref3))}")

    print("KERNEL_OK")
</pallas_src>

<mosaic_0001>
module attributes {stable_mosaic.version = 11 : i64} {
  func.func @_attention_kernel(%arg0: i32, %arg1: memref<8xf32, #tpu.memory_space<smem>>, %arg2: memref<1xi32, #tpu.memory_space<smem>>, %arg3: memref<16x32xf32, #tpu.memory_space<vmem>>, %arg4: memref<128x32xbf16, #tpu.memory_space<vmem>>, %arg5: memref<1x3x128xf32, #tpu.memory_space<vmem>>, %arg6: memref<16x128xf32, #tpu.memory_space<vmem>>, %arg7: memref<32x256xbf16, #tpu.memory_space<vmem>>, %arg8: memref<32x384xbf16, #tpu.memory_space<vmem>>, %arg9: memref<1x32xf32, #tpu.memory_space<vmem>>, %arg10: memref<16x32xf32, #tpu.memory_space<vmem>>) attributes {dimension_semantics = [#tpu.dimension_semantics<parallel>], iteration_bounds = array<i64: 1>, scalar_prefetch = 2 : i64, scratch_operands = 0 : i64, tpu.core_type = #tpu.core_type<tc>, window_params = [{transform_indices = @transform_0, window_bounds = array<i64: 16, 32>}, {transform_indices = @transform_1, window_bounds = array<i64: 128, 32>}, {transform_indices = @transform_2, window_bounds = array<i64: 1, 3, 128>}, {pipeline_mode = #tpu.pipeline_mode<synchronous>, transform_indices = @transform_3, window_bounds = array<i64: 16, 128>}, {pipeline_mode = #tpu.pipeline_mode<synchronous>, transform_indices = @transform_4, window_bounds = array<i64: 32, 256>}, {pipeline_mode = #tpu.pipeline_mode<synchronous>, transform_indices = @transform_5, window_bounds = array<i64: 32, 384>}, {pipeline_mode = #tpu.pipeline_mode<synchronous>, transform_indices = @transform_6, window_bounds = array<i64: 1, 32>}, {transform_indices = @transform_7, window_bounds = array<i64: 16, 32>}]} {
    %0 = arith.index_cast %arg0 : i32 to index
    %1 = memref.load %arg2[%0] : memref<1xi32, #tpu.memory_space<smem>>
    %c0_i32 = arith.constant 0 : i32
    %2 = arith.cmpi ne, %1, %c0_i32 : i32
    %true = arith.constant true
    %3 = arith.xori %2, %true : i1
    %4 = arith.extui %3 : i1 to i32
    %c0_i32_0 = arith.constant 0 : i32
    %5 = arith.cmpi ne, %4, %c0_i32_0 : i32
    scf.if %5 {
      %c0 = arith.constant 0 : index
      %c0_2 = arith.constant 0 : index
      %8 = vector.load %arg3[%c0, %c0_2] : memref<16x32xf32, #tpu.memory_space<vmem>>, vector<16x32xf32>
      %c0_3 = arith.constant 0 : index
      %c0_4 = arith.constant 0 : index
      %9 = vector.load %arg10[%c0_3, %c0_4] : memref<16x32xf32, #tpu.memory_space<vmem>>, vector<16x32xf32>
      tpu.vector_store %arg10[%c0_3, %c0_4], %8 {strides = array<i32>} : memref<16x32xf32, #tpu.memory_space<vmem>>, vector<16x32xf32>,
    } else {
    }
    %6 = arith.extui %2 : i1 to i32
    %c0_i32_1 = arith.constant 0 : i32
    %7 = arith.cmpi ne, %6, %c0_i32_1 : i32
    scf.if %7 {
      %c0 = arith.constant 0 : index
      %c0_2 = arith.constant 0 : index
      %8 = vector.load %arg3[%c0, %c0_2] : memref<16x32xf32, #tpu.memory_space<vmem>>, vector<16x32xf32>
      %c0_3 = arith.constant 0 : index
      %c0_4 = arith.constant 0 : index
      %9 = vector.load %arg4[%c0_3, %c0_4] : memref<128x32xbf16, #tpu.memory_space<vmem>>, vector<128x32xbf16>
      %10 = arith.truncf %8 : vector<16x32xf32> to vector<16x32xbf16>
      %c0_5 = arith.constant 0 : index
      %c0_6 = arith.constant 0 : index
      %11 = vector.load %arg7[%c0_5, %c0_6] : memref<32x256xbf16, #tpu.memory_space<vmem>>, vector<32x256xbf16>
      %cst = arith.constant dense<0.000000e+00> : vector<16x256xf32>
      %12 = tpu.matmul %10, %11, %cst {dimension_numbers = #tpu.dot_dimension_numbers<[1], [0], [0], [1], [0, 0, 1, 1], [], []>} : vector<16x32xbf16>, vector<32x256xbf16>, vector<16x256xf32> -> vector<16x256xf32>
      %c0_7 = arith.constant 0 : index
      %c0_8 = arith.constant 0 : index
      %13 = vector.load %arg8[%c0_7, %c0_8] : memref<32x384xbf16, #tpu.memory_space<vmem>>, vector<32x384xbf16>
      %cst_9 = arith.constant dense<0.000000e+00> : vector<128x384xf32>
      %14 = tpu.matmul %9, %13, %cst_9 {dimension_numbers = #tpu.dot_dimension_numbers<[1], [0], [0], [1], [0, 0, 1, 1], [], []>} : vector<128x32xbf16>, vector<32x384xbf16>, vector<128x384xf32> -> vector<128x384xf32>
      %15 = arith.truncf %12 : vector<16x256xf32> to vector<16x256xbf16>
      %16 = vector.extract_strided_slice %14 {offsets = [0, 0], sizes = [128, 256], strides = [1, 1]} : vector<128x384xf32> to vector<128x256xf32>
      %17 = arith.truncf %16 : vector<128x256xf32> to vector<128x256xbf16>
      %18 = vector.extract_strided_slice %14 {offsets = [0, 256], sizes = [128, 128], strides = [1, 1]} : vector<128x384xf32> to vector<128x128xf32>
      %19 = arith.truncf %18 : vector<128x128xf32> to vector<128x128xbf16>
      %c0_10 = arith.constant 0 : index
      %20 = memref.load %arg1[%c0_10] : memref<8xf32, #tpu.memory_space<smem>>
      %c1 = arith.constant 1 : index
      %21 = memref.load %arg1[%c1] : memref<8xf32, #tpu.memory_space<smem>>
      %c2 = arith.constant 2 : index
      %22 = memref.load %arg1[%c2] : memref<8xf32, #tpu.memory_space<smem>>
      %c3 = arith.constant 3 : index
      %23 = memref.load %arg1[%c3] : memref<8xf32, #tpu.memory_space<smem>>
      %c4 = arith.constant 4 : index
      %24 = memref.load %arg1[%c4] : memref<8xf32, #tpu.memory_space<smem>>
      %c0_11 = arith.constant 0 : index
      %c0_12 = arith.constant 0 : index
      %c0_13 = arith.constant 0 : index
      %25 = vector.load %arg5[%c0_11, %c0_12, %c0_13] : memref<1x3x128xf32, #tpu.memory_space<vmem>>, vector<1x3x128xf32>
      %26 = vector.shape_cast %25 : vector<1x3x128xf32> to vector<3x128xf32>
      %27 = vector.extract_strided_slice %26 {offsets = [0, 0], sizes = [1, 128], strides = [1, 1]} : vector<3x128xf32> to vector<1x128xf32>
      %28 = vector.extract_strided_slice %26 {offsets = [1, 0], sizes = [1, 128], strides = [1, 1]} : vector<3x128xf32> to vector<1x128xf32>
      %29 = vector.extract_strided_slice %26 {offsets = [2, 0], sizes = [1, 128], strides = [1, 1]} : vector<3x128xf32> to vector<1x128xf32>
      %30 = vector.broadcast %22 : f32 to vector<1x128xf32>
      %31 = arith.mulf %30, %27 : vector<1x128xf32>
      %32 = vector.broadcast %20 : f32 to vector<1x128xf32>
      %33 = arith.mulf %32, %28 : vector<1x128xf32>
      %34 = vector.broadcast %21 : f32 to vector<1x128xf32>
      %35 = arith.addf %33, %34 : vector<1x128xf32>
      %36 = vector.broadcast %23 : f32 to vector<1x128xf32>
      %37 = arith.mulf %36, %35 : vector<1x128xf32>
      %38 = arith.addf %31, %37 : vector<1x128xf32>
      %39 = vector.broadcast %24 : f32 to vector<1x128xf32>
      %40 = arith.addf %38, %39 : vector<1x128xf32>
      %41 = math.tanh %40 : vector<1x128xf32>
      %c0_14 = arith.constant 0 : index
      %c0_15 = arith.constant 0 : index
      %42 = vector.load %arg6[%c0_14, %c0_15] : memref<16x128xf32, #tpu.memory_space<vmem>>, vector<16x128xf32>
      %43 = vector.broadcast %29 : vector<1x128xf32> to vector<16x128xf32>
      %44 = arith.mulf %42, %43 : vector<16x128xf32>
      %cst_16 = arith.constant 0.000000e+00 : f32
      %45 = vector.broadcast %cst_16 : f32 to vector<16x128xf32>
      %46 = arith.cmpf ogt, %44, %45 : vector<16x128xf32>
      %cst_17 = arith.constant -1.000000e+09 : f32
      %47 = vector.shape_cast %41 : vector<1x128xf32> to vector<1x128xf32>
      %48 = vector.broadcast %47 : vector<1x128xf32> to vector<16x128xf32>
      %49 = vector.broadcast %cst_17 : f32 to vector<16x128xf32>
      %50 = arith.select %46, %48, %49 : vector<16x128xi1>, vector<16x128xf32>
      %cst_18 = arith.constant dense<0xFF800000> : vector<16xf32>
      %51 = vector.multi_reduction <maximumf>, %44, %cst_18 [1] : vector<16x128xf32> to vector<16xf32>
      %52 = vector.shape_cast %51 : vector<16xf32> to vector<16x1xf32>
      %cst_19 = arith.constant 0.000000e+00 : f32
      %53 = vector.broadcast %cst_19 : f32 to vector<16x1xf32>
      %54 = arith.cmpf ogt, %52, %53 : vector<16x1xf32>
      %55 = vector.extract_strided_slice %15 {offsets = [0, 0], sizes = [16, 64], strides = [1, 1]} : vector<16x256xbf16> to vector<16x64xbf16>
      %56 = vector.extract_strided_slice %17 {offsets = [0, 0], sizes = [128, 64], strides = [1, 1]} : vector<128x256xbf16> to vector<128x64xbf16>
      %cst_20 = arith.constant dense<0.000000e+00> : vector<16x128xf32>
      %57 = tpu.matmul %55, %56, %cst_20 {dimension_numbers = #tpu.dot_dimension_numbers<[1], [1], [0], [0], [0, 0, 1, 0], [], []>} : vector<16x64xbf16>, vector<128x64xbf16>, vector<16x128xf32> -> vector<16x128xf32>
      %cst_21 = arith.constant 1.250000e-01 : f32
      %58 = vector.broadcast %cst_21 : f32 to vector<16x128xf32>
      %59 = arith.mulf %57, %58 : vector<16x128xf32>
      %60 = arith.addf %59, %50 : vector<16x128xf32>
      %61 = vector.extract_strided_slice %15 {offsets = [0, 64], sizes = [16, 64], strides = [1, 1]} : vector<16x256xbf16> to vector<16x64xbf16>
      %62 = vector.extract_strided_slice %17 {offsets = [0, 64], sizes = [128, 64], strides = [1, 1]} : vector<128x256xbf16> to vector<128x64xbf16>
      %cst_22 = arith.constant dense<0.000000e+00> : vector<16x128xf32>
      %63 = tpu.matmul %61, %62, %cst_22 {dimension_numbers = #tpu.dot_dimension_numbers<[1], [1], [0], [0], [0, 0, 1, 0], [], []>} : vector<16x64xbf16>, vector<128x64xbf16>, vector<16x128xf32> -> vector<16x128xf32>
      %cst_23 = arith.constant 1.250000e-01 : f32
      %64 = vector.broadcast %cst_23 : f32 to vector<16x128xf32>
      %65 = arith.mulf %63, %64 : vector<16x128xf32>
      %66 = arith.addf %65, %50 : vector<16x128xf32>
      %67 = vector.extract_strided_slice %15 {offsets = [0, 128], sizes = [16, 64], strides = [1, 1]} : vector<16x256xbf16> to vector<16x64xbf16>
      %68 = vector.extract_strided_slice %17 {offsets = [0, 128], sizes = [128, 64], strides = [1, 1]} : vector<128x256xbf16> to vector<128x64xbf16>
      %cst_24 = arith.constant dense<0.000000e+00> : vector<16x128xf32>
      %69 = tpu.matmul %67, %68, %cst_24 {dimension_numbers = #tpu.dot_dimension_numbers<[1], [1], [0], [0], [0, 0, 1, 0], [], []>} : vector<16x64xbf16>, vector<128x64xbf16>, vector<16x128xf32> -> vector<16x128xf32>
      %cst_25 = arith.constant 1.250000e-01 : f32
      %70 = vector.broadcast %cst_25 : f32 to vector<16x128xf32>
      %71 = arith.mulf %69, %70 : vector<16x128xf32>
      %72 = arith.addf %71, %50 : vector<16x128xf32>
      %73 = vector.extract_strided_slice %15 {offsets = [0, 192], sizes = [16, 64], strides = [1, 1]} : vector<16x256xbf16> to vector<16x64xbf16>
      %74 = vector.extract_strided_slice %17 {offsets = [0, 192], sizes = [128, 64], strides = [1, 1]} : vector<128x256xbf16> to vector<128x64xbf16>
      %cst_26 = arith.constant dense<0.000000e+00> : vector<16x128xf32>
      %75 = tpu.matmul %73, %74, %cst_26 {dimension_numbers = #tpu.dot_dimension_numbers<[1], [1], [0], [0], [0, 0, 1, 0], [], []>} : vector<16x64xbf16>, vector<128x64xbf16>, vector<16x128xf32> -> vector<16x128xf32>
      %cst_27 = arith.constant 1.250000e-01 : f32
      %76 = vector.broadcast %cst_27 : f32 to vector<16x128xf32>
      %77 = arith.mulf %75, %76 : vector<16x128xf32>
      %78 = arith.addf %77, %50 : vector<16x128xf32>
      %79 = tpu.concatenate %60, %66, %72, %78 in 0 : vector<16x128xf32>, vector<16x128xf32>, vector<16x128xf32>, vector<16x128xf32> -> vector<64x128xf32>
      %cst_28 = arith.constant dense<0xFF800000> : vector<64xf32>
      %80 = vector.multi_reduction <maximumf>, %79, %cst_28 [1] : vector<64x128xf32> to vector<64xf32>
      %81 = vector.shape_cast %80 : vector<64xf32> to vector<64x1xf32>
      %82 = vector.broadcast %81 : vector<64x1xf32> to vector<64x128xf32>
      %83 = arith.subf %79, %82 : vector<64x128xf32>
      %84 = math.exp %83 : vector<64x128xf32>
      %cst_29 = arith.constant dense<0.000000e+00> : vector<64xf32>
      %85 = vector.multi_reduction <add>, %84, %cst_29 [1] : vector<64x128xf32> to vector<64xf32>
      %86 = vector.shape_cast %85 : vector<64xf32> to vector<64x1xf32>
      %87 = tpu.reciprocal %86 {approx = true} : vector<64x1xf32> -> vector<64x1xf32>
      %88 = vector.broadcast %87 : vector<64x1xf32> to vector<64x128xf32>
      %89 = arith.mulf %84, %88 : vector<64x128xf32>
      %90 = arith.truncf %89 : vector<64x128xf32> to vector<64x128xbf16>
      %c0_30 = arith.constant 0 : index
      %c0_31 = arith.constant 0 : index
      %91 = vector.load %arg9[%c0_30, %c0_31] : memref<1x32xf32, #tpu.memory_space<vmem>>, vector<1x32xf32>
      %92 = vector.broadcast %91 : vector<1x32xf32> to vector<16x32xf32>
      %93 = arith.addf %92, %8 : vector<16x32xf32>
      %94 = vector.extract_strided_slice %90 {offsets = [0, 0], sizes = [16, 128], strides = [1, 1]} : vector<64x128xbf16> to vector<16x128xbf16>
      %95 = vector.extract_strided_slice %19 {offsets = [0, 0], sizes = [128, 32], strides = [1, 1]} : vector<128x128xbf16> to vector<128x32xbf16>
      %cst_32 = arith.constant dense<0.000000e+00> : vector<16x32xf32>
      %96 = tpu.matmul %94, %95, %cst_32 {dimension_numbers = #tpu.dot_dimension_numbers<[1], [0], [0], [1], [0, 0, 1, 1], [], []>} : vector<16x128xbf16>, vector<128x32xbf16>, vector<16x32xf32> -> vector<16x32xf32>
      %97 = arith.addf %93, %96 : vector<16x32xf32>
      %98 = vector.extract_strided_slice %90 {offsets = [16, 0], sizes = [16, 128], strides = [1, 1]} : vector<64x128xbf16> to vector<16x128xbf16>
      %99 = vector.extract_strided_slice %19 {offsets = [0, 32], sizes = [128, 32], strides = [1, 1]} : vector<128x128xbf16> to vector<128x32xbf16>
      %cst_33 = arith.constant dense<0.000000e+00> : vector<16x32xf32>
      %100 = tpu.matmul %98, %99, %cst_33 {dimension_numbers = #tpu.dot_dimension_numbers<[1], [0], [0], [1], [0, 0, 1, 1], [], []>} : vector<16x128xbf16>, vector<128x32xbf16>, vector<16x32xf32> -> vector<16x32xf32>
      %101 = arith.addf %97, %100 : vector<16x32xf32>
      %102 = vector.extract_strided_slice %90 {offsets = [32, 0], sizes = [16, 128], strides = [1, 1]} : vector<64x128xbf16> to vector<16x128xbf16>
      %103 = vector.extract_strided_slice %19 {offsets = [0, 64], sizes = [128, 32], strides = [1, 1]} : vector<128x128xbf16> to vector<128x32xbf16>
      %cst_34 = arith.constant dense<0.000000e+00> : vector<16x32xf32>
      %104 = tpu.matmul %102, %103, %cst_34 {dimension_numbers = #tpu.dot_dimension_numbers<[1], [0], [0], [1], [0, 0, 1, 1], [], []>} : vector<16x128xbf16>, vector<128x32xbf16>, vector<16x32xf32> -> vector<16x32xf32>
      %105 = arith.addf %101, %104 : vector<16x32xf32>
      %106 = vector.extract_strided_slice %90 {offsets = [48, 0], sizes = [16, 128], strides = [1, 1]} : vector<64x128xbf16> to vector<16x128xbf16>
      %107 = vector.extract_strided_slice %19 {offsets = [0, 96], sizes = [128, 32], strides = [1, 1]} : vector<128x128xbf16> to vector<128x32xbf16>
      %cst_35 = arith.constant dense<0.000000e+00> : vector<16x32xf32>
      %108 = tpu.matmul %106, %107, %cst_35 {dimension_numbers = #tpu.dot_dimension_numbers<[1], [0], [0], [1], [0, 0, 1, 1], [], []>} : vector<16x128xbf16>, vector<128x32xbf16>, vector<16x32xf32> -> vector<16x32xf32>
      %109 = arith.addf %105, %108 : vector<16x32xf32>
      %110 = vector.shape_cast %54 : vector<16x1xi1> to vector<16x1xi1>
      %111 = vector.broadcast %110 : vector<16x1xi1> to vector<16x32xi1>
      %112 = arith.select %111, %109, %8 : vector<16x32xi1>, vector<16x32xf32>
      %c0_36 = arith.constant 0 : index
      %c0_37 = arith.constant 0 : index
      %113 = vector.load %arg10[%c0_36, %c0_37] : memref<16x32xf32, #tpu.memory_space<vmem>>, vector<16x32xf32>
      tpu.vector_store %arg10[%c0_36, %c0_37], %112 {strides = array<i32>} : memref<16x32xf32, #tpu.memory_space<vmem>>, vector<16x32xf32>,
    } else {
    }
    return
  }
  func.func @transform_0(%arg0: i32, %arg1: memref<8xf32, #tpu.memory_space<smem>>, %arg2: memref<1xi32, #tpu.memory_space<smem>>) -> (i32, i32) {
    %c0_i32 = arith.constant 0 : i32
    %c0_i32_0 = arith.constant 0 : i32
    return %arg0, %c0_i32 : i32, i32
  }
  func.func @transform_1(%arg0: i32, %arg1: memref<8xf32, #tpu.memory_space<smem>>, %arg2: memref<1xi32, #tpu.memory_space<smem>>) -> (i32, i32) {
    %c0_i32 = arith.constant 0 : i32
    %c0_i32_0 = arith.constant 0 : i32
    return %arg0, %c0_i32 : i32, i32
  }
  func.func @transform_2(%arg0: i32, %arg1: memref<8xf32, #tpu.memory_space<smem>>, %arg2: memref<1xi32, #tpu.memory_space<smem>>) -> (i32, i32, i32) {
    %c0_i32 = arith.constant 0 : i32
    %c0_i32_0 = arith.constant 0 : i32
    %c0_i32_1 = arith.constant 0 : i32
    return %arg0, %c0_i32, %c0_i32_0 : i32, i32, i32
  }
  func.func @transform_3(%arg0: i32, %arg1: memref<8xf32, #tpu.memory_space<smem>>, %arg2: memref<1xi32, #tpu.memory_space<smem>>) -> (i32, i32) {
    %c0_i32 = arith.constant 0 : i32
    %c0_i32_0 = arith.constant 0 : i32
    %c0_i32_1 = arith.constant 0 : i32
    return %c0_i32, %c0_i32_0 : i32, i32
  }
  func.func @transform_4(%arg0: i32, %arg1: memref<8xf32, #tpu.memory_space<smem>>, %arg2: memref<1xi32, #tpu.memory_space<smem>>) -> (i32, i32) {
    %c0_i32 = arith.constant 0 : i32
    %c0_i32_0 = arith.constant 0 : i32
    %c0_i32_1 = arith.constant 0 : i32
    return %c0_i32, %c0_i32_0 : i32, i32
  }
  func.func @transform_5(%arg0: i32, %arg1: memref<8xf32, #tpu.memory_space<smem>>, %arg2: memref<1xi32, #tpu.memory_space<smem>>) -> (i32, i32) {
    %c0_i32 = arith.constant 0 : i32
    %c0_i32_0 = arith.constant 0 : i32
    %c0_i32_1 = arith.constant 0 : i32
    return %c0_i32, %c0_i32_0 : i32, i32
  }
  func.func @transform_6(%arg0: i32, %arg1: memref<8xf32, #tpu.memory_space<smem>>, %arg2: memref<1xi32, #tpu.memory_space<smem>>) -> (i32, i32) {
    %c0_i32 = arith.constant 0 : i32
    %c0_i32_0 = arith.constant 0 : i32
    %c0_i32_1 = arith.constant 0 : i32
    return %c0_i32, %c0_i32_0 : i32, i32
  }
  func.func @transform_7(%arg0: i32, %arg1: memref<8xf32, #tpu.memory_space<smem>>, %arg2: memref<1xi32, #tpu.memory_space<smem>>) -> (i32, i32) {
    %c0_i32 = arith.constant 0 : i32
    %c0_i32_0 = arith.constant 0 : i32
    return %arg0, %c0_i32 : i32, i32
  }
}

</mosaic_0001>

<llo_original>
// kernel: tpu_custom_call.1
$region0: #{tpu_custom_call.1}
  #allocation0 [shape = 'u32[]', space=smem, size = 0x4, offset = 0x4, fixed_abs, tag = 'smem constant byte address 0x4 - core index']
  #allocation1 [shape = 'u32[144,128]{1,0:T(1,128)}', space=vmem, size = 0x12000, scoped, tag = 'internal scratch']
  #allocation2 [shape = 's32[1]{0}', space=sflag, size = 0x4, scoped, tag = 'scoped memory for tpu_custom_call.1']
  #allocation3 [shape = 'u8[512]{0}', space=smem, size = 0x200, scoped, tag = 'prefetched SMEM operand 0']
  #allocation4 [shape = 's32[1]{0:T(128)S(6)}', space=smem, size = 0x200, scoped, tag = 'prefetched SMEM operand 1']
  %s0 = inlined_call_operand.vmem [shape: f32[8], index: 0, kind: input, shape index: {}]
  %s1 = inlined_call_operand.<no memory space> [shape: s32[1], index: 1, kind: input, shape index: {}]
  %s2 = inlined_call_operand.hbm [shape: f32[16,32], index: 2, kind: input, shape index: {}]
  %s3 = inlined_call_operand.vmem [shape: bf16[128,32], index: 3, kind: input, shape index: {}]
  %s4 = inlined_call_operand.vmem [shape: f32[1,3,128], index: 4, kind: input, shape index: {}]
  %s5 = inlined_call_operand.hbm [shape: f32[16,128], index: 5, kind: input, shape index: {}]
  %s6 = inlined_call_operand.vmem [shape: bf16[32,256], index: 6, kind: input, shape index: {}]
  %s7 = inlined_call_operand.vmem [shape: bf16[32,384], index: 7, kind: input, shape index: {}]
  %s8 = inlined_call_operand.vmem [shape: f32[1,32], index: 8, kind: input, shape index: {}]
  %s9 = inlined_call_operand.hbm [shape: f32[16,32], index: 9, kind: output, shape index: {}]
  %s10 = sld [smem:[#allocation0]]
  $region54: #{tpu_custom_call.1} parent=0
    _
  %s12 = ssub.s32 1, %s10
  %s13 = scalar_select 0, %s12, %s10
  %s14 = sshll.u32 %s0, 4
  %s15 = int_to_ptr.vmem [resolvable:$true] %s14
  %17 = dma.vmem_to_smem %s15, 16, [#allocation3], [#allocation2]
  %18 = sst [smem:[#allocation4]] %s1
  %19 = dma.done [#allocation2], 16
  %20 = sfence
  $region1: #{tpu_custom_call.1} parent=0
    #allocation5 [shape = 'u8[8192]{0}', space=vmem, size = 0x2000, scoped, tag = 'input window, operand 2, single buffered']
    #allocation6 [shape = 's32[1]{0}', space=sflag, size = 0x4, scoped, tag = 'scoped memory for tpu_custom_call.1']
    #allocation7 [shape = 's32[1]{0}', space=sflag, size = 0x4, scoped, tag = 'scoped memory for tpu_custom_call.1']
    #allocation8 [shape = 'u8[8192]{0}', space=vmem, size = 0x2000, scoped, tag = 'input window, operand 5, single buffered']
    #allocation9 [shape = 's32[1]{0}', space=sflag, size = 0x4, scoped, tag = 'scoped memory for tpu_custom_call.1']
    #allocation10 [shape = 'u8[8192]{0}', space=vmem, size = 0x2000, scoped, tag = 'output window, operand 0, single buffered']
    %21 = vsyncpa [#allocation6], 0
    %22 = vsyncpa [#allocation9], 0
    %23 = vsyncpa [#allocation7], 0
    // Predicated region
    $region2: #{tpu_custom_call.1} parent=1 // pred_check
      _
    $region3: #{tpu_custom_call.1} parent=1 // pred_check_branch
      %25 = sbr.rel (0) target = $region5
    $region4: #{tpu_custom_call.1} parent=1 // pred_region
      %s27 = ssub.s32 256, 256
      %28 = vsyncadd [#allocation6], %s27
      %s29 = sshll.u32 [#allocation5], 4
      %s30 = int_to_ptr.vmem [resolvable:$true] %s29
      %35 = dma.hbm_to_vmem [thread:$0]  %s2, 256, %s30, [#allocation6], 128, 128, 8
    $region5: #{tpu_custom_call.1} parent=1 // pred_fallthru
      _
    // Predicated region
    $region6: #{tpu_custom_call.1} parent=1 // pred_check
      _
    $region7: #{tpu_custom_call.1} parent=1 // pred_check_branch
      %37 = sbr.rel (0) target = $region9
    $region8: #{tpu_custom_call.1} parent=1 // pred_region
      _
    $region9: #{tpu_custom_call.1} parent=1 // pred_fallthru
      _
    // Predicated region
    $region10: #{tpu_custom_call.1} parent=1 // pred_check
      _
    $region11: #{tpu_custom_call.1} parent=1 // pred_check_branch
      %39 = sbr.rel (0) target = $region13
    $region12: #{tpu_custom_call.1} parent=1 // pred_region
      _
    $region13: #{tpu_custom_call.1} parent=1 // pred_fallthru
      _
    // Predicated region
    $region14: #{tpu_custom_call.1} parent=1 // pred_check
      _
    $region15: #{tpu_custom_call.1} parent=1 // pred_check_branch
      %41 = sbr.rel (0) target = $region17
    $region16: #{tpu_custom_call.1} parent=1 // pred_region
      %s43 = ssub.s32 256, 256
      %44 = vsyncadd [#allocation9], %s43
      %s45 = sshll.u32 [#allocation8], 4
      %s46 = int_to_ptr.vmem [resolvable:$true] %s45
      %51 = dma.hbm_to_vmem [thread:$0]  %s5, 256, %s46, [#allocation9], 128, 128, 8
    $region17: #{tpu_custom_call.1} parent=1 // pred_fallthru
      _
    // Predicated region
    $region18: #{tpu_custom_call.1} parent=1 // pred_check
      _
    $region19: #{tpu_custom_call.1} parent=1 // pred_check_branch
      %53 = sbr.rel (0) target = $region21
    $region20: #{tpu_custom_call.1} parent=1 // pred_region
      _
    $region21: #{tpu_custom_call.1} parent=1 // pred_fallthru
      _
    // Predicated region
    $region22: #{tpu_custom_call.1} parent=1 // pred_check
      _
    $region23: #{tpu_custom_call.1} parent=1 // pred_check_branch
      %55 = sbr.rel (0) target = $region25
    $region24: #{tpu_custom_call.1} parent=1 // pred_region
      _
    $region25: #{tpu_custom_call.1} parent=1 // pred_fallthru
      _
    // Predicated region
    $region26: #{tpu_custom_call.1} parent=1 // pred_check
      _
    $region27: #{tpu_custom_call.1} parent=1 // pred_check_branch
      %57 = sbr.rel (0) target = $region29
    $region28: #{tpu_custom_call.1} parent=1 // pred_region
      _
    $region29: #{tpu_custom_call.1} parent=1 // pred_fallthru
      _
    // Predicated region
    $region30: #{tpu_custom_call.1} parent=1 // pred_check
      _
    $region31: #{tpu_custom_call.1} parent=1 // pred_check_branch
      %59 = sbr.rel (0) target = $region33
    $region32: #{tpu_custom_call.1} parent=1 // pred_region
      %60 = dma.done [#allocation6], 256
    $region33: #{tpu_custom_call.1} parent=1 // pred_fallthru
      _
    // Predicated region
    $region34: #{tpu_custom_call.1} parent=1 // pred_check
      _
    $region35: #{tpu_custom_call.1} parent=1 // pred_check_branch
      %62 = sbr.rel (0) target = $region37
    $region36: #{tpu_custom_call.1} parent=1 // pred_region
      %63 = dma.done [#allocation9], 256
    $region37: #{tpu_custom_call.1} parent=1 // pred_fallthru
      _
    %s65 = sld [smem:[#allocation4]]
    %p66 = scmp.ne.s32.totalorder %s65, 0
    %p67 = scmp.eq.s32.totalorder %s65, 0
    // Predicated region
    $region38: #{tpu_custom_call.1} parent=1 // pred_check
      %p68 = pneg %p67
    $region39: #{tpu_custom_call.1} parent=1 // pred_check_branch
      %70 = sbr.rel (%p68) target = $region41
    $region40: #{tpu_custom_call.1} parent=1 // pred_region
      %v71 = vld [vmem:[#allocation5] sm:$0xff]
      %v72 = vld [vmem:[#allocation5 + $0x8] sm:$0xff]
      %vm73 = vcmask 261120
      %74 = vst.msk [vmem:[#allocation10] sm:$0xff] %vm73, %v71
      %75 = vst.msk [vmem:[#allocation10 + $0x8] sm:$0xff] %vm73, %v72
    $region41: #{tpu_custom_call.1} parent=1 // pred_fallthru
      _
    // Predicated region
    $region42: #{tpu_custom_call.1} parent=1 // pred_check
      %p76 = pneg %p66
    $region43: #{tpu_custom_call.1} parent=1 // pred_check_branch
      %78 = sbr.rel (%p76) target = $region45
    $region44: #{tpu_custom_call.1} parent=1 // pred_region
      %v79 = vld [vmem:[#allocation5] sm:$0xff]
      %v80 = vld [vmem:[#allocation5 + $0x8] sm:$0xff]
      %v81 = vld [vmem:[%s3] sm:$0xf]
      %v82 = vld [vmem:[%s3 + $0x4] sm:$0xf]
      %v83 = vld [vmem:[%s3 + $0x8] sm:$0xf]
      %v84 = vld [vmem:[%s3 + $0xc] sm:$0xf]
      %v85 = vld [vmem:[%s3 + $0x10] sm:$0xf]
      %v86 = vld [vmem:[%s3 + $0x14] sm:$0xf]
      %v87 = vld [vmem:[%s3 + $0x18] sm:$0xf]
      %v88 = vld [vmem:[%s3 + $0x1c] sm:$0xf]
      %v89 = vld [vmem:[%s3 + $0x20] sm:$0xf]
      %v90 = vld [vmem:[%s3 + $0x24] sm:$0xf]
      %v91 = vld [vmem:[%s3 + $0x28] sm:$0xf]
      %v92 = vld [vmem:[%s3 + $0x2c] sm:$0xf]
      %v93 = vld [vmem:[%s3 + $0x30] sm:$0xf]
      %v94 = vld [vmem:[%s3 + $0x34] sm:$0xf]
      %v95 = vld [vmem:[%s3 + $0x38] sm:$0xf]
      %v96 = vld [vmem:[%s3 + $0x3c] sm:$0xf]
      %v97 = vpack.c.bf16 %v80, %v79
      %v98 = vld [vmem:[%s6] sm:$0xff]
      %v99 = vld [vmem:[%s6 + $0x8] sm:$0xff]
      %v100 = vld [vmem:[%s6 + $0x10] sm:$0xff]
      %v101 = vld [vmem:[%s6 + $0x18] sm:$0xff]
      %v106 = vunpack.c.l.b16 %v98
      %v107 = vunpack.c.h.b16 %v98
      %v108 = vunpack.c.l.b16 %v99
      %v109 = vunpack.c.h.b16 %v99
      %v110 = vunpack.c.l.b16 %v100
      %v111 = vunpack.c.h.b16 %v100
      %v112 = vunpack.c.l.b16 %v101
      %v113 = vunpack.c.h.b16 %v101
      %v114 = vpack.c.b16 %v108, %v106
      %v115 = vpack.c.b16 %v109, %v107
      %v116 = vpack.c.b16 %v112, %v110
      %v117 = vpack.c.b16 %v113, %v111
      %vm122 = vcmask 261120
      %v124 = vsel %vm122, %v97, 0
      %126 = vmatprep.subr.bf16.mxu0 %v115
      %127 = vmatpush1.bf16.msra.mxu0 %v114
      %128 = vmatprep.subr.bf16.mxu0 %v117
      %129 = vmatpush1.bf16.msra.mxu0 %v116
      %130 = vmatprep.subr.bf16.mxu0 0
      %131 = vmatpush1.bf16.msra.mxu0 0
      %132 = vmatprep.subr.bf16.mxu0 0
      %133 = vmatpush1.bf16.msra.mxu0 0
      %134 = vmatprep.subr.bf16.mxu0 0
      %135 = vmatpush1.bf16.msra.mxu0 0
      %136 = vmatprep.subr.bf16.mxu0 0
      %137 = vmatpush1.bf16.msra.mxu0 0
      %138 = vmatprep.subr.bf16.mxu0 0
      %139 = vmatpush1.bf16.msra.mxu0 0
      %140 = vmatprep.subr.bf16.mxu0 0
      %141 = vmatpush1.bf16.msra.mxu0 0
      %142 = vmatprep.subr.bf16.mxu0 0
      %143 = vmatpush1.bf16.msra.mxu0 0
      %144 = vmatprep.subr.bf16.mxu0 0
      %145 = vmatpush1.bf16.msra.mxu0 0
      %146 = vmatprep.subr.bf16.mxu0 0
      %147 = vmatpush1.bf16.msra.mxu0 0
      %148 = vmatprep.subr.bf16.mxu0 0
      %149 = vmatpush1.bf16.msra.mxu0 0
      %150 = vmatprep.subr.bf16.mxu0 0
      %151 = vmatpush1.bf16.msra.mxu0 0
      %152 = vmatprep.subr.bf16.mxu0 0
      %153 = vmatpush1.bf16.msra.mxu0 0
      %154 = vmatprep.subr.bf16.mxu0 0
      %155 = vmatpush1.bf16.msra.mxu0 0
      %156 = vmatprep.subr.bf16.mxu0 0
      %157 = vmatpush1.bf16.msra.mxu0 0
      %158 = vmatprep.mubr.bf16.mxu0 0
      %159 = vmatmul.mubr.bf16.gmra.mrb[0].mxu0 %v124
      %v160 = vpop.f32.mrb[0].mxu0
      %v161 = vadd.f32 0.0, %v160
      %v162 = vpop.f32.mrb[0].mxu0
      %v163 = vadd.f32 0.0, %v162
      %v164 = vpop.f32.mrb[0].mxu0
      %v165 = vadd.f32 0.0, %v164
      %v166 = vpop.f32.mrb[0].mxu0
      %v167 = vadd.f32 0.0, %v166
      %168 = vdwg.mxu0
      %v169 = vld [vmem:[%s7] sm:$0xff]
      %v170 = vld [vmem:[%s7 + $0x8] sm:$0xf]
      %v171 = vld [vmem:[%s7 + $0xc] sm:$0xff]
      %v172 = vld [vmem:[%s7 + $0x14] sm:$0xf]
      %v173 = vld [vmem:[%s7 + $0x18] sm:$0xff]
      %v174 = vld [vmem:[%s7 + $0x20] sm:$0xf]
      %v175 = vld [vmem:[%s7 + $0x24] sm:$0xff]
      %v176 = vld [vmem:[%s7 + $0x2c] sm:$0xf]
      %v193 = vunpack.c.l.b16 %v81
      %v194 = vunpack.c.l.b16 %v82
      %v195 = vunpack.c.l.b16 %v83
      %v196 = vunpack.c.l.b16 %v84
      %v197 = vunpack.c.l.b16 %v85
      %v198 = vunpack.c.l.b16 %v86
      %v199 = vunpack.c.l.b16 %v87
      %v200 = vunpack.c.l.b16 %v88
      %v201 = vunpack.c.l.b16 %v89
      %v202 = vunpack.c.l.b16 %v90
      %v203 = vunpack.c.l.b16 %v91
      %v204 = vunpack.c.l.b16 %v92
      %v205 = vunpack.c.l.b16 %v93
      %v206 = vunpack.c.l.b16 %v94
      %v207 = vunpack.c.l.b16 %v95
      %v208 = vunpack.c.l.b16 %v96
      %v209 = vpack.c.b16 %v194, %v193
      %v210 = vpack.c.b16 %v196, %v195
      %v211 = vpack.c.b16 %v198, %v197
      %v212 = vpack.c.b16 %v200, %v199
      %v213 = vpack.c.b16 %v202, %v201
      %v214 = vpack.c.b16 %v204, %v203
      %v215 = vpack.c.b16 %v206, %v205
      %v216 = vpack.c.b16 %v208, %v207
      %v225 = vunpack.c.l.b16 %v169
      %v226 = vunpack.c.h.b16 %v169
      %v227 = vunpack.c.l.b16 %v170
      %v228 = vunpack.c.l.b16 %v171
      %v229 = vunpack.c.h.b16 %v171
      %v230 = vunpack.c.l.b16 %v172
      %v231 = vunpack.c.l.b16 %v173
      %v232 = vunpack.c.h.b16 %v173
      %v233 = vunpack.c.l.b16 %v174
      %v234 = vunpack.c.l.b16 %v175
      %v235 = vunpack.c.h.b16 %v175
      %v236 = vunpack.c.l.b16 %v176
      %v237 = vpack.c.b16 %v228, %v225
      %v238 = vpack.c.b16 %v229, %v226
      %v239 = vpack.c.b16 %v230, %v227
      %v240 = vpack.c.b16 %v234, %v231
      %v241 = vpack.c.b16 %v235, %v232
      %v242 = vpack.c.b16 %v236, %v233
      %v250 = vsel %vm122, %v209, 0
      %v253 = vsel %vm122, %v210, 0
      %v256 = vsel %vm122, %v211, 0
      %v259 = vsel %vm122, %v212, 0
      %v262 = vsel %vm122, %v213, 0
      %v265 = vsel %vm122, %v214, 0
      %v268 = vsel %vm122, %v215, 0
      %v271 = vsel %vm122, %v216, 0
      %273 = vmatprep.subr.bf16.mxu0 %v238
      %274 = vmatpush1.bf16.msra.mxu0 %v237
      %275 = vmatprep.subr.bf16.mxu0 %v241
      %276 = vmatpush1.bf16.msra.mxu0 %v240
      %277 = vmatprep.subr.bf16.mxu0 0
      %278 = vmatpush1.bf16.msra.mxu0 0
      %279 = vmatprep.subr.bf16.mxu0 0
      %280 = vmatpush1.bf16.msra.mxu0 0
      %281 = vmatprep.subr.bf16.mxu0 0
      %282 = vmatpush1.bf16.msra.mxu0 0
      %283 = vmatprep.subr.bf16.mxu0 0
      %284 = vmatpush1.bf16.msra.mxu0 0
      %285 = vmatprep.subr.bf16.mxu0 0
      %286 = vmatpush1.bf16.msra.mxu0 0
      %287 = vmatprep.subr.bf16.mxu0 0
      %288 = vmatpush1.bf16.msra.mxu0 0
      %289 = vmatprep.subr.bf16.mxu0 0
      %290 = vmatpush1.bf16.msra.mxu0 0
      %291 = vmatprep.subr.bf16.mxu0 0
      %292 = vmatpush1.bf16.msra.mxu0 0
      %293 = vmatprep.subr.bf16.mxu0 0
      %294 = vmatpush1.bf16.msra.mxu0 0
      %295 = vmatprep.subr.bf16.mxu0 0
      %296 = vmatpush1.bf16.msra.mxu0 0
      %297 = vmatprep.subr.bf16.mxu0 0
      %298 = vmatpush1.bf16.msra.mxu0 0
      %299 = vmatprep.subr.bf16.mxu0 0
      %300 = vmatpush1.bf16.msra.mxu0 0
      %301 = vmatprep.subr.bf16.mxu0 0
      %302 = vmatpush1.bf16.msra.mxu0 0
      %303 = vmatprep.subr.bf16.mxu0 0
      %304 = vmatpush1.bf16.msra.mxu0 0
      %305 = vmatprep.mubr.bf16.mxu0 0
      %306 = vmatmul.mubr.bf16.gmra.mrb[0].mxu0 %v250
      %v307 = vpop.f32.mrb[0].mxu0
      %v308 = vadd.f32 0.0, %v307
      %v309 = vpop.f32.mrb[0].mxu0
      %v310 = vadd.f32 0.0, %v309
      %v311 = vpop.f32.mrb[0].mxu0
      %v312 = vadd.f32 0.0, %v311
      %v313 = vpop.f32.mrb[0].mxu0
      %v314 = vadd.f32 0.0, %v313
      %315 = vmatprep.mubr.bf16.mxu0 0
      %316 = vmatmul.mubr.bf16.gmra.mrb[0].mxu0 %v253
      %v317 = vpop.f32.mrb[0].mxu0
      %v318 = vadd.f32 0.0, %v317
      %v319 = vpop.f32.mrb[0].mxu0
      %v320 = vadd.f32 0.0, %v319
      %v321 = vpop.f32.mrb[0].mxu0
      %v322 = vadd.f32 0.0, %v321
      %v323 = vpop.f32.mrb[0].mxu0
      %v324 = vadd.f32 0.0, %v323
      %325 = vmatprep.mubr.bf16.mxu0 0
      %326 = vmatmul.mubr.bf16.gmra.mrb[0].mxu0 %v256
      %v327 = vpop.f32.mrb[0].mxu0
      %v328 = vadd.f32 0.0, %v327
      %v329 = vpop.f32.mrb[0].mxu0
      %v330 = vadd.f32 0.0, %v329
      %v331 = vpop.f32.mrb[0].mxu0
      %v332 = vadd.f32 0.0, %v331
      %v333 = vpop.f32.mrb[0].mxu0
      %v334 = vadd.f32 0.0, %v333
      %335 = vmatprep.mubr.bf16.mxu0 0
      %336 = vmatmul.mubr.bf16.gmra.mrb[0].mxu0 %v259
      %v337 = vpop.f32.mrb[0].mxu0
      %v338 = vadd.f32 0.0, %v337
      %v339 = vpop.f32.mrb[0].mxu0
      %v340 = vadd.f32 0.0, %v339
      %v341 = vpop.f32.mrb[0].mxu0
      %v342 = vadd.f32 0.0, %v341
      %v343 = vpop.f32.mrb[0].mxu0
      %v344 = vadd.f32 0.0, %v343
      %345 = vmatprep.mubr.bf16.mxu0 0
      %346 = vmatmul.mubr.bf16.gmra.mrb[0].mxu0 %v262
      %v347 = vpop.f32.mrb[0].mxu0
      %v348 = vadd.f32 0.0, %v347
      %v349 = vpop.f32.mrb[0].mxu0
      %v350 = vadd.f32 0.0, %v349
      %v351 = vpop.f32.mrb[0].mxu0
      %v352 = vadd.f32 0.0, %v351
      %v353 = vpop.f32.mrb[0].mxu0
      %v354 = vadd.f32 0.0, %v353
      %355 = vmatprep.mubr.bf16.mxu0 0
      %356 = vmatmul.mubr.bf16.gmra.mrb[0].mxu0 %v265
      %v357 = vpop.f32.mrb[0].mxu0
      %v358 = vadd.f32 0.0, %v357
      %v359 = vpop.f32.mrb[0].mxu0
      %v360 = vadd.f32 0.0, %v359
      %v361 = vpop.f32.mrb[0].mxu0
      %v362 = vadd.f32 0.0, %v361
      %v363 = vpop.f32.mrb[0].mxu0
      %v364 = vadd.f32 0.0, %v363
      %365 = vmatprep.mubr.bf16.mxu0 0
      %366 = vmatmul.mubr.bf16.gmra.mrb[0].mxu0 %v268
      %v367 = vpop.f32.mrb[0].mxu0
      %v368 = vadd.f32 0.0, %v367
      %v369 = vpop.f32.mrb[0].mxu0
      %v370 = vadd.f32 0.0, %v369
      %v371 = vpop.f32.mrb[0].mxu0
      %v372 = vadd.f32 0.0, %v371
      %v373 = vpop.f32.mrb[0].mxu0
      %v374 = vadd.f32 0.0, %v373
      %375 = vmatprep.mubr.bf16.mxu0 0
      %376 = vmatmul.mubr.bf16.gmra.mrb[0].mxu0 %v271
      %v377 = vpop.f32.mrb[0].mxu0
      %v378 = vadd.f32 0.0, %v377
      %v379 = vpop.f32.mrb[0].mxu0
      %v380 = vadd.f32 0.0, %v379
      %v381 = vpop.f32.mrb[0].mxu0
      %v382 = vadd.f32 0.0, %v381
      %v383 = vpop.f32.mrb[0].mxu0
      %v384 = vadd.f32 0.0, %v383
      %385 = vdwg.mxu0
      %386 = vmatprep.subr.bf16.mxu0 0
      %387 = vmatpush1.bf16.msra.mxu0 %v239
      %388 = vmatprep.subr.bf16.mxu0 0
      %389 = vmatpush1.bf16.msra.mxu0 %v242
      %390 = vmatprep.subr.bf16.mxu0 0
      %391 = vmatpush1.bf16.msra.mxu0 0
      %392 = vmatprep.subr.bf16.mxu0 0
      %393 = vmatpush1.bf16.msra.mxu0 0
      %394 = vmatprep.subr.bf16.mxu0 0
      %395 = vmatpush1.bf16.msra.mxu0 0
      %396 = vmatprep.subr.bf16.mxu0 0
      %397 = vmatpush1.bf16.msra.mxu0 0
      %398 = vmatprep.subr.bf16.mxu0 0
      %399 = vmatpush1.bf16.msra.mxu0 0
      %400 = vmatprep.subr.bf16.mxu0 0
      %401 = vmatpush1.bf16.msra.mxu0 0
      %402 = vmatprep.subr.bf16.mxu0 0
      %403 = vmatpush1.bf16.msra.mxu0 0
      %404 = vmatprep.subr.bf16.mxu0 0
      %405 = vmatpush1.bf16.msra.mxu0 0
      %406 = vmatprep.subr.bf16.mxu0 0
      %407 = vmatpush1.bf16.msra.mxu0 0
      %408 = vmatprep.subr.bf16.mxu0 0
      %409 = vmatpush1.bf16.msra.mxu0 0
      %410 = vmatprep.subr.bf16.mxu0 0
      %411 = vmatpush1.bf16.msra.mxu0 0
      %412 = vmatprep.subr.bf16.mxu0 0
      %413 = vmatpush1.bf16.msra.mxu0 0
      %414 = vmatprep.subr.bf16.mxu0 0
      %415 = vmatpush1.bf16.msra.mxu0 0
      %416 = vmatprep.subr.bf16.mxu0 0
      %417 = vmatpush1.bf16.msra.mxu0 0
      %418 = vmatprep.mubr.bf16.mxu0 0
      %419 = vmatmul.mubr.bf16.gmra.mrb[0].mxu0 %v250
      %v420 = vpop.f32.mrb[0].mxu0
      %v421 = vadd.f32 0.0, %v420
      %v422 = vpop.f32.mrb[0].mxu0
      %v423 = vpop.f32.mrb[0].mxu0
      %v424 = vadd.f32 0.0, %v423
      %v425 = vpop.f32.mrb[0].mxu0
      %426 = vmatprep.mubr.bf16.mxu0 0
      %427 = vmatmul.mubr.bf16.gmra.mrb[0].mxu0 %v253
      %v428 = vpop.f32.mrb[0].mxu0
      %v429 = vadd.f32 0.0, %v428
      %v430 = vpop.f32.mrb[0].mxu0
      %v431 = vpop.f32.mrb[0].mxu0
      %v432 = vadd.f32 0.0, %v431
      %v433 = vpop.f32.mrb[0].mxu0
      %434 = vmatprep.mubr.bf16.mxu0 0
      %435 = vmatmul.mubr.bf16.gmra.mrb[0].mxu0 %v256
      %v436 = vpop.f32.mrb[0].mxu0
      %v437 = vadd.f32 0.0, %v436
      %v438 = vpop.f32.mrb[0].mxu0
      %v439 = vpop.f32.mrb[0].mxu0
      %v440 = vadd.f32 0.0, %v439
      %v441 = vpop.f32.mrb[0].mxu0
      %442 = vmatprep.mubr.bf16.mxu0 0
      %443 = vmatmul.mubr.bf16.gmra.mrb[0].mxu0 %v259
      %v444 = vpop.f32.mrb[0].mxu0
      %v445 = vadd.f32 0.0, %v444
      %v446 = vpop.f32.mrb[0].mxu0
      %v447 = vpop.f32.mrb[0].mxu0
      %v448 = vadd.f32 0.0, %v447
      %v449 = vpop.f32.mrb[0].mxu0
      %450 = vmatprep.mubr.bf16.mxu0 0
      %451 = vmatmul.mubr.bf16.gmra.mrb[0].mxu0 %v262
      %v452 = vpop.f32.mrb[0].mxu0
      %v453 = vadd.f32 0.0, %v452
      %v454 = vpop.f32.mrb[0].mxu0
      %v455 = vpop.f32.mrb[0].mxu0
      %v456 = vadd.f32 0.0, %v455
      %v457 = vpop.f32.mrb[0].mxu0
      %458 = vmatprep.mubr.bf16.mxu0 0
      %459 = vmatmul.mubr.bf16.gmra.mrb[0].mxu0 %v265
      %v460 = vpop.f32.mrb[0].mxu0
      %v461 = vadd.f32 0.0, %v460
      %v462 = vpop.f32.mrb[0].mxu0
      %v463 = vpop.f32.mrb[0].mxu0
      %v464 = vadd.f32 0.0, %v463
      %v465 = vpop.f32.mrb[0].mxu0
      %466 = vmatprep.mubr.bf16.mxu0 0
      %467 = vmatmul.mubr.bf16.gmra.mrb[0].mxu0 %v268
      %v468 = vpop.f32.mrb[0].mxu0
      %v469 = vadd.f32 0.0, %v468
      %v470 = vpop.f32.mrb[0].mxu0
      %v471 = vpop.f32.mrb[0].mxu0
      %v472 = vadd.f32 0.0, %v471
      %v473 = vpop.f32.mrb[0].mxu0
      %474 = vmatprep.mubr.bf16.mxu0 0
      %475 = vmatmul.mubr.bf16.gmra.mrb[0].mxu0 %v271
      %v476 = vpop.f32.mrb[0].mxu0
      %v477 = vadd.f32 0.0, %v476
      %v478 = vpop.f32.mrb[0].mxu0
      %v479 = vpop.f32.mrb[0].mxu0
      %v480 = vadd.f32 0.0, %v479
      %v481 = vpop.f32.mrb[0].mxu0
      %482 = vdwg.mxu0
      %v483 = vpack.c.bf16 %v165, %v161
      %v484 = vpack.c.bf16 %v167, %v163
      %v485 = vpack.c.bf16 %v312, %v308
      %v486 = vpack.c.bf16 %v314, %v310
      %v487 = vpack.c.bf16 %v322, %v318
      %v488 = vpack.c.bf16 %v324, %v320
      %v489 = vpack.c.bf16 %v332, %v328
      %v490 = vpack.c.bf16 %v334, %v330
      %v491 = vpack.c.bf16 %v342, %v338
      %v492 = vpack.c.bf16 %v344, %v340
      %v493 = vpack.c.bf16 %v352, %v348
      %v494 = vpack.c.bf16 %v354, %v350
      %v495 = vpack.c.bf16 %v362, %v358
      %v496 = vpack.c.bf16 %v364, %v360
      %v497 = vpack.c.bf16 %v372, %v368
      %v498 = vpack.c.bf16 %v374, %v370
      %v499 = vpack.c.bf16 %v382, %v378
      %v500 = vpack.c.bf16 %v384, %v380
      %v501 = vpack.c.bf16 %v424, %v421
      %v502 = vpack.c.bf16 %v432, %v429
      %v503 = vpack.c.bf16 %v440, %v437
      %v504 = vpack.c.bf16 %v448, %v445
      %v505 = vpack.c.bf16 %v456, %v453
      %v506 = vpack.c.bf16 %v464, %v461
      %v507 = vpack.c.bf16 %v472, %v469
      %v508 = vpack.c.bf16 %v480, %v477
      %s509 = sld [smem:[#allocation3]]
      %s510 = sld [smem:[#allocation3 + $0x1]]
      %s511 = sld [smem:[#allocation3 + $0x2]]
      %s512 = sld [smem:[#allocation3 + $0x3]]
      %s513 = sld [smem:[#allocation3 + $0x4]]
      %v514 = vld [vmem:[%s4] sm:$0x7]
      %v515 = vstv %s511
      %v516 = vmul.f32 %v515, %v514
      %v517 = vstv %s509
      %v518 = vmul.f32 %v517, %v514
      %v519 = vstv %s510
      %v520 = vadd.f32 %v518, %v519
      %v521 = vstv %s512
      %v522 = vmul.f32 %v521, %v520
      %v524 = vrot.slane %v522, 1
      %v526 = vadd.f32 %v516, %v524
      %v527 = vstv %s513
      %v528 = vadd.f32 %v526, %v527
      %v529 = vtanh.pop %v528
      %v530 = vld [vmem:[#allocation8] sm:$0xff]
      %v531 = vld [vmem:[#allocation8 + $0x8] sm:$0xff]
      %v532 = vlaneseq
      %v533 = vshrl.u32 %v532, 7
      %v534 = vsub.s32 2, %v533
      %v535 = vrot.slane %v514, %v534
      %v536 = vmul.f32 %v530, %v535
      %v537 = vmul.f32 %v531, %v535
      %vm538 = vcmp.gt.f32.partialorder %v536, 0.0
      %vm539 = vcmp.gt.f32.partialorder %v537, 0.0
      %v540 = vlaneseq
      %v541 = vshrl.u32 %v540, 7
      %v542 = vsub.s32 0, %v541
      %v543 = vrot.slane %v529, %v542
      %v544 = vsel %vm538, %v543, -1e+09
      %v545 = vsel %vm539, %v543, -1e+09
      %546 = vmax.xlane.f32.xlu0 %v536
      %v547 = vpop.xlane.xlu0 %546
      %548 = vmax.xlane.f32.xlu0 %v537
      %v549 = vpop.xlane.xlu0 %548
      %vm550 = vcmp.gt.f32.partialorder %v547, 0.0
      %vm551 = vcmp.gt.f32.partialorder %v549, 0.0
      %vm552 = vcmask 523264
      %v554 = vsel %vm552, %v483, 0
      %v557 = vsel %vm552, %v485, 0
      %v560 = vsel %vm552, %v487, 0
      %v563 = vsel %vm552, %v489, 0
      %v566 = vsel %vm552, %v491, 0
      %v569 = vsel %vm552, %v493, 0
      %v572 = vsel %vm552, %v495, 0
      %v575 = vsel %vm552, %v497, 0
      %v578 = vsel %vm552, %v499, 0
      %580 = vmatprep.subr.bf16.mxu0 0
      %581 = vmatpush1.bf16.xpose.msra.mxu0 %v557
      %582 = vmatprep.subr.bf16.mxu0 0
      %583 = vmatpush1.bf16.xpose.msra.mxu0 %v560
      %584 = vmatprep.subr.bf16.mxu0 0
      %585 = vmatpush1.bf16.xpose.msra.mxu0 %v563
      %586 = vmatprep.subr.bf16.mxu0 0
      %587 = vmatpush1.bf16.xpose.msra.mxu0 %v566
      %588 = vmatprep.subr.bf16.mxu0 0
      %589 = vmatpush1.bf16.xpose.msra.mxu0 %v569
      %590 = vmatprep.subr.bf16.mxu0 0
      %591 = vmatpush1.bf16.xpose.msra.mxu0 %v572
      %592 = vmatprep.subr.bf16.mxu0 0
      %593 = vmatpush1.bf16.xpose.msra.mxu0 %v575
      %594 = vmatprep.subr.bf16.mxu0 0
      %595 = vmatpush1.bf16.xpose.msra.mxu0 %v578
      %596 = vmatprep.subr.bf16.mxu0 0
      %597 = vmatpush1.bf16.xpose.msra.mxu0 0
      %598 = vmatprep.subr.bf16.mxu0 0
      %599 = vmatpush1.bf16.xpose.msra.mxu0 0
      %600 = vmatprep.subr.bf16.mxu0 0
      %601 = vmatpush1.bf16.xpose.msra.mxu0 0
      %602 = vmatprep.subr.bf16.mxu0 0
      %603 = vmatpush1.bf16.xpose.msra.mxu0 0
      %604 = vmatprep.subr.bf16.mxu0 0
      %605 = vmatpush1.bf16.xpose.msra.mxu0 0
      %606 = vmatprep.subr.bf16.mxu0 0
      %607 = vmatpush1.bf16.xpose.msra.mxu0 0
      %608 = vmatprep.subr.bf16.mxu0 0
      %609 = vmatpush1.bf16.xpose.msra.mxu0 0
      %610 = vmatprep.subr.bf16.mxu0 0
      %611 = vmatpush1.bf16.xpose.msra.mxu0 0
      %612 = vmatprep.mubr.bf16.mxu0 0
      %613 = vmatmul.mubr.bf16.gmra.mrb[0].mxu0 %v554
      %v614 = vpop.f32.mrb[0].mxu0
      %v615 = vadd.f32 0.0, %v614
      %v616 = vpop.f32.mrb[0].mxu0
      %v617 = vpop.f32.mrb[0].mxu0
      %v618 = vadd.f32 0.0, %v617
      %v619 = vpop.f32.mrb[0].mxu0
      %620 = vdwg.mxu0
      %v621 = vmul.f32 %v615, 0.125
      %v622 = vmul.f32 %v618, 0.125
      %v623 = vadd.f32 %v621, %v544
      %v624 = vadd.f32 %v622, %v545
      %626 = vrot.lane.b32.xlu0 %v483, 64
      %v627 = vpop.permute.xlu0 %626
      %636 = vrot.lane.b32.xlu0 %v485, 64
      %v637 = vpop.permute.xlu0 %636
      %638 = vrot.lane.b32.xlu0 %v487, 64
      %v639 = vpop.permute.xlu0 %638
      %640 = vrot.lane.b32.xlu0 %v489, 64
      %v641 = vpop.permute.xlu0 %640
      %642 = vrot.lane.b32.xlu0 %v491, 64
      %v643 = vpop.permute.xlu0 %642
      %644 = vrot.lane.b32.xlu0 %v493, 64
      %v645 = vpop.permute.xlu0 %644
      %646 = vrot.lane.b32.xlu0 %v495, 64
      %v647 = vpop.permute.xlu0 %646
      %648 = vrot.lane.b32.xlu0 %v497, 64
      %v649 = vpop.permute.xlu0 %648
      %650 = vrot.lane.b32.xlu0 %v499, 64
      %v651 = vpop.permute.xlu0 %650
      %v653 = vsel %vm552, %v627, 0
      %v656 = vsel %vm552, %v637, 0
      %v659 = vsel %vm552, %v639, 0
      %v662 = vsel %vm552, %v641, 0
      %v665 = vsel %vm552, %v643, 0
      %v668 = vsel %vm552, %v645, 0
      %v671 = vsel %vm552, %v647, 0
      %v674 = vsel %vm552, %v649, 0
      %v677 = vsel %vm552, %v651, 0
      %679 = vmatprep.subr.bf16.mxu0 0
      %680 = vmatpush1.bf16.xpose.msra.mxu0 %v656
      %681 = vmatprep.subr.bf16.mxu0 0
      %682 = vmatpush1.bf16.xpose.msra.mxu0 %v659
      %683 = vmatprep.subr.bf16.mxu0 0
      %684 = vmatpush1.bf16.xpose.msra.mxu0 %v662
      %685 = vmatprep.subr.bf16.mxu0 0
      %686 = vmatpush1.bf16.xpose.msra.mxu0 %v665
      %687 = vmatprep.subr.bf16.mxu0 0
      %688 = vmatpush1.bf16.xpose.msra.mxu0 %v668
      %689 = vmatprep.subr.bf16.mxu0 0
      %690 = vmatpush1.bf16.xpose.msra.mxu0 %v671
      %691 = vmatprep.subr.bf16.mxu0 0
      %692 = vmatpush1.bf16.xpose.msra.mxu0 %v674
      %693 = vmatprep.subr.bf16.mxu0 0
      %694 = vmatpush1.bf16.xpose.msra.mxu0 %v677
      %695 = vmatprep.subr.bf16.mxu0 0
      %696 = vmatpush1.bf16.xpose.msra.mxu0 0
      %697 = vmatprep.subr.bf16.mxu0 0
      %698 = vmatpush1.bf16.xpose.msra.mxu0 0
      %699 = vmatprep.subr.bf16.mxu0 0
      %700 = vmatpush1.bf16.xpose.msra.mxu0 0
      %701 = vmatprep.subr.bf16.mxu0 0
      %702 = vmatpush1.bf16.xpose.msra.mxu0 0
      %703 = vmatprep.subr.bf16.mxu0 0
      %704 = vmatpush1.bf16.xpose.msra.mxu0 0
      %705 = vmatprep.subr.bf16.mxu0 0
      %706 = vmatpush1.bf16.xpose.msra.mxu0 0
      %707 = vmatprep.subr.bf16.mxu0 0
      %708 = vmatpush1.bf16.xpose.msra.mxu0 0
      %709 = vmatprep.subr.bf16.mxu0 0
      %710 = vmatpush1.bf16.xpose.msra.mxu0 0
      %711 = vmatprep.mubr.bf16.mxu0 0
      %712 = vmatmul.mubr.bf16.gmra.mrb[0].mxu0 %v653
      %v713 = vpop.f32.mrb[0].mxu0
      %v714 = vadd.f32 0.0, %v713
      %v715 = vpop.f32.mrb[0].mxu0
      %v716 = vpop.f32.mrb[0].mxu0
      %v717 = vadd.f32 0.0, %v716
      %v718 = vpop.f32.mrb[0].mxu0
      %719 = vdwg.mxu0
      %v720 = vmul.f32 %v714, 0.125
      %v721 = vmul.f32 %v717, 0.125
      %v722 = vadd.f32 %v720, %v544
      %v723 = vadd.f32 %v721, %v545
      %v725 = vsel %vm552, %v484, 0
      %v728 = vsel %vm552, %v486, 0
      %v731 = vsel %vm552, %v488, 0
      %v734 = vsel %vm552, %v490, 0
      %v737 = vsel %vm552, %v492, 0
      %v740 = vsel %vm552, %v494, 0
      %v743 = vsel %vm552, %v496, 0
      %v746 = vsel %vm552, %v498, 0
      %v749 = vsel %vm552, %v500, 0
      %751 = vmatprep.subr.bf16.mxu0 0
      %752 = vmatpush1.bf16.xpose.msra.mxu0 %v728
      %753 = vmatprep.subr.bf16.mxu0 0
      %754 = vmatpush1.bf16.xpose.msra.mxu0 %v731
      %755 = vmatprep.subr.bf16.mxu0 0
      %756 = vmatpush1.bf16.xpose.msra.mxu0 %v734
      %757 = vmatprep.subr.bf16.mxu0 0
      %758 = vmatpush1.bf16.xpose.msra.mxu0 %v737
      %759 = vmatprep.subr.bf16.mxu0 0
      %760 = vmatpush1.bf16.xpose.msra.mxu0 %v740
      %761 = vmatprep.subr.bf16.mxu0 0
      %762 = vmatpush1.bf16.xpose.msra.mxu0 %v743
      %763 = vmatprep.subr.bf16.mxu0 0
      %764 = vmatpush1.bf16.xpose.msra.mxu0 %v746
      %765 = vmatprep.subr.bf16.mxu0 0
      %766 = vmatpush1.bf16.xpose.msra.mxu0 %v749
      %767 = vmatprep.subr.bf16.mxu0 0
      %768 = vmatpush1.bf16.xpose.msra.mxu0 0
      %769 = vmatprep.subr.bf16.mxu0 0
      %770 = vmatpush1.bf16.xpose.msra.mxu0 0
      %771 = vmatprep.subr.bf16.mxu0 0
      %772 = vmatpush1.bf16.xpose.msra.mxu0 0
      %773 = vmatprep.subr.bf16.mxu0 0
      %774 = vmatpush1.bf16.xpose.msra.mxu0 0
      %775 = vmatprep.subr.bf16.mxu0 0
      %776 = vmatpush1.bf16.xpose.msra.mxu0 0
      %777 = vmatprep.subr.bf16.mxu0 0
      %778 = vmatpush1.bf16.xpose.msra.mxu0 0
      %779 = vmatprep.subr.bf16.mxu0 0
      %780 = vmatpush1.bf16.xpose.msra.mxu0 0
      %781 = vmatprep.subr.bf16.mxu0 0
      %782 = vmatpush1.bf16.xpose.msra.mxu0 0
      %783 = vmatprep.mubr.bf16.mxu0 0
      %784 = vmatmul.mubr.bf16.gmra.mrb[0].mxu0 %v725
      %v785 = vpop.f32.mrb[0].mxu0
      %v786 = vadd.f32 0.0, %v785
      %v787 = vpop.f32.mrb[0].mxu0
      %v788 = vpop.f32.mrb[0].mxu0
      %v789 = vadd.f32 0.0, %v788
      %v790 = vpop.f32.mrb[0].mxu0
      %791 = vdwg.mxu0
      %v792 = vmul.f32 %v786, 0.125
      %v793 = vmul.f32 %v789, 0.125
      %v794 = vadd.f32 %v792, %v544
      %v795 = vadd.f32 %v793, %v545
      %797 = vrot.lane.b32.xlu0 %v484, 64
      %v798 = vpop.permute.xlu0 %797
      %807 = vrot.lane.b32.xlu0 %v486, 64
      %v808 = vpop.permute.xlu0 %807
      %809 = vrot.lane.b32.xlu0 %v488, 64
      %v810 = vpop.permute.xlu0 %809
      %811 = vrot.lane.b32.xlu0 %v490, 64
      %v812 = vpop.permute.xlu0 %811
      %813 = vrot.lane.b32.xlu0 %v492, 64
      %v814 = vpop.permute.xlu0 %813
      %815 = vrot.lane.b32.xlu0 %v494, 64
      %v816 = vpop.permute.xlu0 %815
      %817 = vrot.lane.b32.xlu0 %v496, 64
      %v818 = vpop.permute.xlu0 %817
      %819 = vrot.lane.b32.xlu0 %v498, 64
      %v820 = vpop.permute.xlu0 %819
      %821 = vrot.lane.b32.xlu0 %v500, 64
      %v822 = vpop.permute.xlu0 %821
      %v824 = vsel %vm552, %v798, 0
      %v827 = vsel %vm552, %v808, 0
      %v830 = vsel %vm552, %v810, 0
      %v833 = vsel %vm552, %v812, 0
      %v836 = vsel %vm552, %v814, 0
      %v839 = vsel %vm552, %v816, 0
      %v842 = vsel %vm552, %v818, 0
      %v845 = vsel %vm552, %v820, 0
      %v848 = vsel %vm552, %v822, 0
      %850 = vmatprep.subr.bf16.mxu0 0
      %851 = vmatpush1.bf16.xpose.msra.mxu0 %v827
      %852 = vmatprep.subr.bf16.mxu0 0
      %853 = vmatpush1.bf16.xpose.msra.mxu0 %v830
      %854 = vmatprep.subr.bf16.mxu0 0
      %855 = vmatpush1.bf16.xpose.msra.mxu0 %v833
      %856 = vmatprep.subr.bf16.mxu0 0
      %857 = vmatpush1.bf16.xpose.msra.mxu0 %v836
      %858 = vmatprep.subr.bf16.mxu0 0
      %859 = vmatpush1.bf16.xpose.msra.mxu0 %v839
      %860 = vmatprep.subr.bf16.mxu0 0
      %861 = vmatpush1.bf16.xpose.msra.mxu0 %v842
      %862 = vmatprep.subr.bf16.mxu0 0
      %863 = vmatpush1.bf16.xpose.msra.mxu0 %v845
      %864 = vmatprep.subr.bf16.mxu0 0
      %865 = vmatpush1.bf16.xpose.msra.mxu0 %v848
      %866 = vmatprep.subr.bf16.mxu0 0
      %867 = vmatpush1.bf16.xpose.msra.mxu0 0
      %868 = vmatprep.subr.bf16.mxu0 0
      %869 = vmatpush1.bf16.xpose.msra.mxu0 0
      %870 = vmatprep.subr.bf16.mxu0 0
      %871 = vmatpush1.bf16.xpose.msra.mxu0 0
      %872 = vmatprep.subr.bf16.mxu0 0
      %873 = vmatpush1.bf16.xpose.msra.mxu0 0
      %874 = vmatprep.subr.bf16.mxu0 0
      %875 = vmatpush1.bf16.xpose.msra.mxu0 0
      %876 = vmatprep.subr.bf16.mxu0 0
      %877 = vmatpush1.bf16.xpose.msra.mxu0 0
      %878 = vmatprep.subr.bf16.mxu0 0
      %879 = vmatpush1.bf16.xpose.msra.mxu0 0
      %880 = vmatprep.subr.bf16.mxu0 0
      %881 = vmatpush1.bf16.xpose.msra.mxu0 0
      %882 = vmatprep.mubr.bf16.mxu0 0
      %883 = vmatmul.mubr.bf16.gmra.mrb[0].mxu0 %v824
      %v884 = vpop.f32.mrb[0].mxu0
      %v885 = vadd.f32 0.0, %v884
      %v886 = vpop.f32.mrb[0].mxu0
      %v887 = vpop.f32.mrb[0].mxu0
      %v888 = vadd.f32 0.0, %v887
      %v889 = vpop.f32.mrb[0].mxu0
      %890 = vdwg.mxu0
      %v891 = vmul.f32 %v885, 0.125
      %v892 = vmul.f32 %v888, 0.125
      %v893 = vadd.f32 %v891, %v544
      %v894 = vadd.f32 %v892, %v545
      %895 = vmax.xlane.f32.xlu0 %v623
      %v896 = vpop.xlane.xlu0 %895
      %897 = vmax.xlane.f32.xlu0 %v624
      %v898 = vpop.xlane.xlu0 %897
      %899 = vmax.xlane.f32.xlu0 %v722
      %v900 = vpop.xlane.xlu0 %899
      %901 = vmax.xlane.f32.xlu0 %v723
      %v902 = vpop.xlane.xlu0 %901
      %903 = vmax.xlane.f32.xlu0 %v794
      %v904 = vpop.xlane.xlu0 %903
      %905 = vmax.xlane.f32.xlu0 %v795
      %v906 = vpop.xlane.xlu0 %905
      %907 = vmax.xlane.f32.xlu0 %v893
      %v908 = vpop.xlane.xlu0 %907
      %909 = vmax.xlane.f32.xlu0 %v894
      %v910 = vpop.xlane.xlu0 %909
      %v911 = vsub.f32 %v623, %v896
      %v912 = vsub.f32 %v624, %v898
      %v913 = vsub.f32 %v722, %v900
      %v914 = vsub.f32 %v723, %v902
      %v915 = vsub.f32 %v794, %v904
      %v916 = vsub.f32 %v795, %v906
      %v917 = vsub.f32 %v893, %v908
      %v918 = vsub.f32 %v894, %v910
      %v919 = vmul.f32 %v911, 1.442695
      %v920 = vpow.pop %v919
      %v921 = vmul.f32 %v912, 1.442695
      %v922 = vpow.pop %v921
      %v923 = vmul.f32 %v913, 1.442695
      %v924 = vpow.pop %v923
      %v925 = vmul.f32 %v914, 1.442695
      %v926 = vpow.pop %v925
      %v927 = vmul.f32 %v915, 1.442695
      %v928 = vpow.pop %v927
      %v929 = vmul.f32 %v916, 1.442695
      %v930 = vpow.pop %v929
      %v931 = vmul.f32 %v917, 1.442695
      %v932 = vpow.pop %v931
      %v933 = vmul.f32 %v918, 1.442695
      %v934 = vpow.pop %v933
      %935 = vadd.xlane.f32.xlu0 %v920
      %v936 = vpop.xlane.xlu0 %935
      %937 = vadd.xlane.f32.xlu0 %v922
      %v938 = vpop.xlane.xlu0 %937
      %939 = vadd.xlane.f32.xlu0 %v924
      %v940 = vpop.xlane.xlu0 %939
      %941 = vadd.xlane.f32.xlu0 %v926
      %v942 = vpop.xlane.xlu0 %941
      %943 = vadd.xlane.f32.xlu0 %v928
      %v944 = vpop.xlane.xlu0 %943
      %945 = vadd.xlane.f32.xlu0 %v930
      %v946 = vpop.xlane.xlu0 %945
      %947 = vadd.xlane.f32.xlu0 %v932
      %v948 = vpop.xlane.xlu0 %947
      %949 = vadd.xlane.f32.xlu0 %v934
      %v950 = vpop.xlane.xlu0 %949
      %v951 = vrcp.pop %v936
      %v952 = vrcp.pop %v938
      %v953 = vrcp.pop %v940
      %v954 = vrcp.pop %v942
      %v955 = vrcp.pop %v944
      %v956 = vrcp.pop %v946
      %v957 = vrcp.pop %v948
      %v958 = vrcp.pop %v950
      %v959 = vmul.f32 %v920, %v951
      %v960 = vmul.f32 %v922, %v952
      %v961 = vmul.f32 %v924, %v953
      %v962 = vmul.f32 %v926, %v954
      %v963 = vmul.f32 %v928, %v955
      %v964 = vmul.f32 %v930, %v956
      %v965 = vmul.f32 %v932, %v957
      %v966 = vmul.f32 %v934, %v958
      %v967 = vpack.c.bf16 %v960, %v959
      %v968 = vpack.c.bf16 %v962, %v961
      %v969 = vpack.c.bf16 %v964, %v963
      %v970 = vpack.c.bf16 %v966, %v965
      %v971 = vld [vmem:[%s8] sm:$0x1]
      %v973 = vlaneseq
      %v974 = vshrl.u32 %v973, 7
      %v975 = vsub.s32 0, %v974
      %v976 = vrot.slane %v971, %v975
      %v978 = vadd.f32 %v976, %v79
      %v979 = vadd.f32 %v976, %v80
      %980 = vmatprep.subr.bf16.mxu0 0
      %981 = vmatpush1.bf16.msra.mxu0 %v501
      %982 = vmatprep.subr.bf16.mxu0 0
      %983 = vmatpush1.bf16.msra.mxu0 %v502
      %984 = vmatprep.subr.bf16.mxu0 0
      %985 = vmatpush1.bf16.msra.mxu0 %v503
      %986 = vmatprep.subr.bf16.mxu0 0
      %987 = vmatpush1.bf16.msra.mxu0 %v504
      %988 = vmatprep.subr.bf16.mxu0 0
      %989 = vmatpush1.bf16.msra.mxu0 %v505
      %990 = vmatprep.subr.bf16.mxu0 0
      %991 = vmatpush1.bf16.msra.mxu0 %v506
      %992 = vmatprep.subr.bf16.mxu0 0
      %993 = vmatpush1.bf16.msra.mxu0 %v507
      %994 = vmatprep.subr.bf16.mxu0 0
      %995 = vmatpush1.bf16.msra.mxu0 %v508
      %996 = vmatprep.subr.bf16.mxu0 0
      %997 = vmatpush1.bf16.msra.mxu0 0
      %998 = vmatprep.subr.bf16.mxu0 0
      %999 = vmatpush1.bf16.msra.mxu0 0
      %1000 = vmatprep.subr.bf16.mxu0 0
      %1001 = vmatpush1.bf16.msra.mxu0 0
      %1002 = vmatprep.subr.bf16.mxu0 0
      %1003 = vmatpush1.bf16.msra.mxu0 0
      %1004 = vmatprep.subr.bf16.mxu0 0
      %1005 = vmatpush1.bf16.msra.mxu0 0
      %1006 = vmatprep.subr.bf16.mxu0 0
      %1007 = vmatpush1.bf16.msra.mxu0 0
      %1008 = vmatprep.subr.bf16.mxu0 0
      %1009 = vmatpush1.bf16.msra.mxu0 0
      %1010 = vmatprep.subr.bf16.mxu0 0
      %1011 = vmatpush1.bf16.msra.mxu0 0
      %1012 = vmatprep.mubr.bf16.mxu0 0
      %1013 = vmatmul.mubr.bf16.gmra.mrb[0].mxu0 %v967
      %v1014 = vpop.f32.mrb[0].mxu0
      %v1015 = vadd.f32 0.0, %v1014
      %v1016 = vpop.f32.mrb[0].mxu0
      %v1017 = vpop.f32.mrb[0].mxu0
      %v1018 = vadd.f32 0.0, %v1017
      %v1019 = vpop.f32.mrb[0].mxu0
      %1020 = vdwg.mxu0
      %v1021 = vadd.f32 %v978, %v1015
      %v1022 = vadd.f32 %v979, %v1018
      %1031 = vrot.lane.b32.xlu0 %v501, 96
      %v1032 = vpop.permute.xlu0 %1031
      %1033 = vrot.lane.b32.xlu0 %v502, 96
      %v1034 = vpop.permute.xlu0 %1033
      %1035 = vrot.lane.b32.xlu0 %v503, 96
      %v1036 = vpop.permute.xlu0 %1035
      %1037 = vrot.lane.b32.xlu0 %v504, 96
      %v1038 = vpop.permute.xlu0 %1037
      %1039 = vrot.lane.b32.xlu0 %v505, 96
      %v1040 = vpop.permute.xlu0 %1039
      %1041 = vrot.lane.b32.xlu0 %v506, 96
      %v1042 = vpop.permute.xlu0 %1041
      %1043 = vrot.lane.b32.xlu0 %v507, 96
      %v1044 = vpop.permute.xlu0 %1043
      %1045 = vrot.lane.b32.xlu0 %v508, 96
      %v1046 = vpop.permute.xlu0 %1045
      %1055 = vmatprep.subr.bf16.mxu0 0
      %1056 = vmatpush1.bf16.msra.mxu0 %v1032
      %1057 = vmatprep.subr.bf16.mxu0 0
      %1058 = vmatpush1.bf16.msra.mxu0 %v1034
      %1059 = vmatprep.subr.bf16.mxu0 0
      %1060 = vmatpush1.bf16.msra.mxu0 %v1036
      %1061 = vmatprep.subr.bf16.mxu0 0
      %1062 = vmatpush1.bf16.msra.mxu0 %v1038
      %1063 = vmatprep.subr.bf16.mxu0 0
      %1064 = vmatpush1.bf16.msra.mxu0 %v1040
      %1065 = vmatprep.subr.bf16.mxu0 0
      %1066 = vmatpush1.bf16.msra.mxu0 %v1042
      %1067 = vmatprep.subr.bf16.mxu0 0
      %1068 = vmatpush1.bf16.msra.mxu0 %v1044
      %1069 = vmatprep.subr.bf16.mxu0 0
      %1070 = vmatpush1.bf16.msra.mxu0 %v1046
      %1071 = vmatprep.subr.bf16.mxu0 0
      %1072 = vmatpush1.bf16.msra.mxu0 0
      %1073 = vmatprep.subr.bf16.mxu0 0
      %1074 = vmatpush1.bf16.msra.mxu0 0
      %1075 = vmatprep.subr.bf16.mxu0 0
      %1076 = vmatpush1.bf16.msra.mxu0 0
      %1077 = vmatprep.subr.bf16.mxu0 0
      %1078 = vmatpush1.bf16.msra.mxu0 0
      %1079 = vmatprep.subr.bf16.mxu0 0
      %1080 = vmatpush1.bf16.msra.mxu0 0
      %1081 = vmatprep.subr.bf16.mxu0 0
      %1082 = vmatpush1.bf16.msra.mxu0 0
      %1083 = vmatprep.subr.bf16.mxu0 0
      %1084 = vmatpush1.bf16.msra.mxu0 0
      %1085 = vmatprep.subr.bf16.mxu0 0
      %1086 = vmatpush1.bf16.msra.mxu0 0
      %1087 = vmatprep.mubr.bf16.mxu0 0
      %1088 = vmatmul.mubr.bf16.gmra.mrb[0].mxu0 %v968
      %v1089 = vpop.f32.mrb[0].mxu0
      %v1090 = vadd.f32 0.0, %v1089
      %v1091 = vpop.f32.mrb[0].mxu0
      %v1092 = vpop.f32.mrb[0].mxu0
      %v1093 = vadd.f32 0.0, %v1092
      %v1094 = vpop.f32.mrb[0].mxu0
      %1095 = vdwg.mxu0
      %v1096 = vadd.f32 %v1021, %v1090
      %v1097 = vadd.f32 %v1022, %v1093
      %1098 = vrot.lane.b32.xlu0 %v501, 64
      %v1099 = vpop.permute.xlu0 %1098
      %1100 = vrot.lane.b32.xlu0 %v502, 64
      %v1101 = vpop.permute.xlu0 %1100
      %1102 = vrot.lane.b32.xlu0 %v503, 64
      %v1103 = vpop.permute.xlu0 %1102
      %1104 = vrot.lane.b32.xlu0 %v504, 64
      %v1105 = vpop.permute.xlu0 %1104
      %1106 = vrot.lane.b32.xlu0 %v505, 64
      %v1107 = vpop.permute.xlu0 %1106
      %1108 = vrot.lane.b32.xlu0 %v506, 64
      %v1109 = vpop.permute.xlu0 %1108
      %1110 = vrot.lane.b32.xlu0 %v507, 64
      %v1111 = vpop.permute.xlu0 %1110
      %1112 = vrot.lane.b32.xlu0 %v508, 64
      %v1113 = vpop.permute.xlu0 %1112
      %1122 = vmatprep.subr.bf16.mxu0 0
      %1123 = vmatpush1.bf16.msra.mxu0 %v1099
      %1124 = vmatprep.subr.bf16.mxu0 0
      %1125 = vmatpush1.bf16.msra.mxu0 %v1101
      %1126 = vmatprep.subr.bf16.mxu0 0
      %1127 = vmatpush1.bf16.msra.mxu0 %v1103
      %1128 = vmatprep.subr.bf16.mxu0 0
      %1129 = vmatpush1.bf16.msra.mxu0 %v1105
      %1130 = vmatprep.subr.bf16.mxu0 0
      %1131 = vmatpush1.bf16.msra.mxu0 %v1107
      %1132 = vmatprep.subr.bf16.mxu0 0
      %1133 = vmatpush1.bf16.msra.mxu0 %v1109
      %1134 = vmatprep.subr.bf16.mxu0 0
      %1135 = vmatpush1.bf16.msra.mxu0 %v1111
      %1136 = vmatprep.subr.bf16.mxu0 0
      %1137 = vmatpush1.bf16.msra.mxu0 %v1113
      %1138 = vmatprep.subr.bf16.mxu0 0
      %1139 = vmatpush1.bf16.msra.mxu0 0
      %1140 = vmatprep.subr.bf16.mxu0 0
      %1141 = vmatpush1.bf16.msra.mxu0 0
      %1142 = vmatprep.subr.bf16.mxu0 0
      %1143 = vmatpush1.bf16.msra.mxu0 0
      %1144 = vmatprep.subr.bf16.mxu0 0
      %1145 = vmatpush1.bf16.msra.mxu0 0
      %1146 = vmatprep.subr.bf16.mxu0 0
      %1147 = vmatpush1.bf16.msra.mxu0 0
      %1148 = vmatprep.subr.bf16.mxu0 0
      %1149 = vmatpush1.bf16.msra.mxu0 0
      %1150 = vmatprep.subr.bf16.mxu0 0
      %1151 = vmatpush1.bf16.msra.mxu0 0
      %1152 = vmatprep.subr.bf16.mxu0 0
      %1153 = vmatpush1.bf16.msra.mxu0 0
      %1154 = vmatprep.mubr.bf16.mxu0 0
      %1155 = vmatmul.mubr.bf16.gmra.mrb[0].mxu0 %v969
      %v1156 = vpop.f32.mrb[0].mxu0
      %v1157 = vadd.f32 0.0, %v1156
      %v1158 = vpop.f32.mrb[0].mxu0
      %v1159 = vpop.f32.mrb[0].mxu0
      %v1160 = vadd.f32 0.0, %v1159
      %v1161 = vpop.f32.mrb[0].mxu0
      %1162 = vdwg.mxu0
      %v1163 = vadd.f32 %v1096, %v1157
      %v1164 = vadd.f32 %v1097, %v1160
      %1165 = vrot.lane.b32.xlu0 %v501, 32
      %v1166 = vpop.permute.xlu0 %1165
      %1167 = vrot.lane.b32.xlu0 %v502, 32
      %v1168 = vpop.permute.xlu0 %1167
      %1169 = vrot.lane.b32.xlu0 %v503, 32
      %v1170 = vpop.permute.xlu0 %1169
      %1171 = vrot.lane.b32.xlu0 %v504, 32
      %v1172 = vpop.permute.xlu0 %1171
      %1173 = vrot.lane.b32.xlu0 %v505, 32
      %v1174 = vpop.permute.xlu0 %1173
      %1175 = vrot.lane.b32.xlu0 %v506, 32
      %v1176 = vpop.permute.xlu0 %1175
      %1177 = vrot.lane.b32.xlu0 %v507, 32
      %v1178 = vpop.permute.xlu0 %1177
      %1179 = vrot.lane.b32.xlu0 %v508, 32
      %v1180 = vpop.permute.xlu0 %1179
      %1189 = vmatprep.subr.bf16.mxu0 0
      %1190 = vmatpush1.bf16.msra.mxu0 %v1166
      %1191 = vmatprep.subr.bf16.mxu0 0
      %1192 = vmatpush1.bf16.msra.mxu0 %v1168
      %1193 = vmatprep.subr.bf16.mxu0 0
      %1194 = vmatpush1.bf16.msra.mxu0 %v1170
      %1195 = vmatprep.subr.bf16.mxu0 0
      %1196 = vmatpush1.bf16.msra.mxu0 %v1172
      %1197 = vmatprep.subr.bf16.mxu0 0
      %1198 = vmatpush1.bf16.msra.mxu0 %v1174
      %1199 = vmatprep.subr.bf16.mxu0 0
      %1200 = vmatpush1.bf16.msra.mxu0 %v1176
      %1201 = vmatprep.subr.bf16.mxu0 0
      %1202 = vmatpush1.bf16.msra.mxu0 %v1178
      %1203 = vmatprep.subr.bf16.mxu0 0
      %1204 = vmatpush1.bf16.msra.mxu0 %v1180
      %1205 = vmatprep.subr.bf16.mxu0 0
      %1206 = vmatpush1.bf16.msra.mxu0 0
      %1207 = vmatprep.subr.bf16.mxu0 0
      %1208 = vmatpush1.bf16.msra.mxu0 0
      %1209 = vmatprep.subr.bf16.mxu0 0
      %1210 = vmatpush1.bf16.msra.mxu0 0
      %1211 = vmatprep.subr.bf16.mxu0 0
      %1212 = vmatpush1.bf16.msra.mxu0 0
      %1213 = vmatprep.subr.bf16.mxu0 0
      %1214 = vmatpush1.bf16.msra.mxu0 0
      %1215 = vmatprep.subr.bf16.mxu0 0
      %1216 = vmatpush1.bf16.msra.mxu0 0
      %1217 = vmatprep.subr.bf16.mxu0 0
      %1218 = vmatpush1.bf16.msra.mxu0 0
      %1219 = vmatprep.subr.bf16.mxu0 0
      %1220 = vmatpush1.bf16.msra.mxu0 0
      %1221 = vmatprep.mubr.bf16.mxu0 0
      %1222 = vmatmul.mubr.bf16.gmra.mrb[0].mxu0 %v970
      %v1223 = vpop.f32.mrb[0].mxu0
      %v1224 = vadd.f32 0.0, %v1223
      %v1225 = vpop.f32.mrb[0].mxu0
      %v1226 = vpop.f32.mrb[0].mxu0
      %v1227 = vadd.f32 0.0, %v1226
      %v1228 = vpop.f32.mrb[0].mxu0
      %1229 = vdwg.mxu0
      %v1230 = vadd.f32 %v1163, %v1224
      %v1231 = vadd.f32 %v1164, %v1227
      %v1232 = vsel %vm550, 1, 0
      %v1233 = vsel %vm551, 1, 0
      %vm1234 = vcmp.eq.s32.totalorder %v1232, 1
      %vm1235 = vcmp.eq.s32.totalorder %v1233, 1
      %v1236 = vsel %vm1234, %v1230, %v79
      %v1237 = vsel %vm1235, %v1231, %v80
      %1238 = vst.msk [vmem:[#allocation10] sm:$0xff] %vm122, %v1236
      %1239 = vst.msk [vmem:[#allocation10 + $0x8] sm:$0xff] %vm122, %v1237
    $region45: #{tpu_custom_call.1} parent=1 // pred_fallthru
      _
    // Predicated region
    $region46: #{tpu_custom_call.1} parent=1 // pred_check
      _
    $region47: #{tpu_custom_call.1} parent=1 // pred_check_branch
      %1241 = sbr.rel (0) target = $region49
    $region48: #{tpu_custom_call.1} parent=1 // pred_region
      %s1243 = ssub.s32 256, 256
      %1244 = vsyncadd [#allocation7], %s1243
      %s1245 = sshll.u32 [#allocation10], 4
      %s1246 = int_to_ptr.vmem [resolvable:$true] %s1245
      %1251 = dma.vmem_to_hbm [thread:$0]  %s1246, 256, %s9, [#allocation7], 128, 128, 8
    $region49: #{tpu_custom_call.1} parent=1 // pred_fallthru
      _
    // Predicated region
    $region50: #{tpu_custom_call.1} parent=1 // pred_check
      _
    $region51: #{tpu_custom_call.1} parent=1 // pred_check_branch
      %1253 = sbr.rel (0) target = $region53
    $region52: #{tpu_custom_call.1} parent=1 // pred_region
      %1254 = dma.done [#allocation7], 256
    $region53: #{tpu_custom_call.1} parent=1 // pred_fallthru
      _
    %1255 = vsyncpa [#allocation6], 1
    %1256 = vsyncpa [#allocation9], 1
    %1257 = vsyncpa [#allocation7], 1

</llo_original>
